<compile_context>
chip_gen: v6e
topology: v6e:2x2x1
jax: 0.10.0
libtpu: 0.0.40
codegen_flags: <defaults>
</compile_context>

<pallas_src>
import functools
from enum import IntEnum

import numpy as np
import jax
import jax.numpy as jnp
from jax.experimental import pallas as pl
from jax.experimental.pallas import tpu as pltpu

# ----------------------------- config flags (mirror `config.*`) ----------------
ENABLE_SKIP_CONNECTIONS = True
ENABLE_INTERMEDIATE_SUPERVISION = True
LOCATION_REFINEMENT = True

VMEM_LIMIT = 48 * 1024 * 1024          # safe on v5e/v6e (128 MiB) and v7x (64 MiB)
_MM_SINGLE_K_BUDGET = 16 * 1024 * 1024  # double-buffered A+B bytes for 1 K-step


class DeeperCutHead(IntEnum):          # IntEnum -> orderable dict keys for pytrees
    part_detection = 1
    locref = 2
    intermediate_supervision = 3


def _round_up(x, m):
    return ((x + m - 1) // m) * m


# =============================== Pallas kernels ================================

def _mm_kernel(*refs, has_shift, has_res, relu, nk):
    """Tiled matmul with fused (shift, residual, relu) epilogue, bf16 output."""
    idx = 0
    a_ref = refs[idx]; idx += 1
    b_ref = refs[idx]; idx += 1
    t_ref = r_ref = None
    if has_shift:
        t_ref = refs[idx]; idx += 1
    if has_res:
        r_ref = refs[idx]; idx += 1
    o_ref = refs[idx]; idx += 1
    acc_ref = refs[idx] if nk > 1 else None

    def epilogue(y):
        if has_shift:
            y = y + t_ref[...]
        if has_res:
            y = y + r_ref[...].astype(jnp.float32)
        if relu:
            y = jnp.maximum(y, 0.0)
        return y.astype(o_ref.dtype)

    if nk == 1:
        # Fast path: no accumulator scratch, single store of the output tile.
        y = jnp.dot(a_ref[...], b_ref[...], preferred_element_type=jnp.float32)
        o_ref[...] = epilogue(y)
    else:
        k = pl.program_id(2)

        @pl.when(k == 0)
        def _():
            acc_ref[...] = jnp.dot(a_ref[...], b_ref[...],
                                   preferred_element_type=jnp.float32)

        @pl.when(k > 0)
        def _():
            acc_ref[...] += jnp.dot(a_ref[...], b_ref[...],
                                    preferred_element_type=jnp.float32)

        @pl.when(k == nk - 1)
        def _():
            o_ref[...] = epilogue(acc_ref[...])


def _pick_m_tile(M):
    for t in (512, 256, 128):
        if M % t == 0:
            return t, M
    if M <= 512:                       # full-extent tile for tiny-M deep layers
        t = _round_up(M, 16)
        return t, t
    return 256, _round_up(M, 256)


def _pick_n_tile(N, m_tiles):
    """Largest 128-multiple tile dividing N that still yields >=2 parallel tiles
    (so both v7x TensorCores get work); else largest divisor; else full N."""
    best = None
    for t in (512, 256, 128):
        if N % t == 0:
            if best is None:
                best = t
            if m_tiles * (N // t) >= 2:
                return t
    return best if best is not None else N


def matmul_fused(a, b, shift=None, residual=None, relu=False,
                 out_dtype=jnp.bfloat16):
    """(M,K)@(K,N) on the MXU (bf16 operands, f32 accumulation) with a fused
    per-output-channel  y = acc + shift (+ residual) (+ relu)  epilogue."""
    M, K = a.shape
    K2, N = b.shape
    assert K == K2
    tm, Mp = _pick_m_tile(M)
    m_tiles = Mp // tm
    tn = _pick_n_tile(N, m_tiles)
    Np = N

    if 4 * K * (tm + tn) <= _MM_SINGLE_K_BUDGET:
        tk, Kp = K, K                 # single K step: fast path in the kernel
    else:
        tk = 2048
        Kp = _round_up(K, tk)
    nk = Kp // tk

    a_p = a.astype(jnp.bfloat16)
    if (Mp, Kp) != (M, K):
        a_p = jnp.pad(a_p, ((0, Mp - M), (0, Kp - K)))
    b_p = b.astype(jnp.bfloat16)
    if Kp != K:
        b_p = jnp.pad(b_p, ((0, Kp - K), (0, 0)))

    inputs = [a_p, b_p]
    in_specs = [pl.BlockSpec((tm, tk), lambda i, j, k: (i, k)),
                pl.BlockSpec((tk, tn), lambda i, j, k: (k, j))]

    has_shift = shift is not None
    has_res = residual is not None
    if has_shift:
        inputs.append(shift.astype(jnp.float32).reshape(1, N))
        in_specs.append(pl.BlockSpec((1, tn), lambda i, j, k: (0, j)))
    if has_res:
        r = residual
        if Mp != M:
            r = jnp.pad(r, ((0, Mp - M), (0, 0)))
        inputs.append(r)
        in_specs.append(pl.BlockSpec((tm, tn), lambda i, j, k: (i, j)))

    kernel = functools.partial(_mm_kernel, has_shift=has_shift, has_res=has_res,
                               relu=relu, nk=nk)
    out = pl.pallas_call(
        kernel,
        out_shape=jax.ShapeDtypeStruct((Mp, Np), out_dtype),
        grid_spec=pltpu.PrefetchScalarGridSpec(
            num_scalar_prefetch=0,
            grid=(Mp // tm, Np // tn, nk),
            in_specs=in_specs,
            out_specs=pl.BlockSpec((tm, tn), lambda i, j, k: (i, j)),
            scratch_shapes=([pltpu.VMEM((tm, tn), jnp.float32)] if nk > 1 else [])),
        compiler_params=pltpu.CompilerParams(
            dimension_semantics=("parallel", "parallel", "arbitrary"),
            vmem_limit_bytes=VMEM_LIMIT),
    )(*inputs)
    if Mp != M:
        out = out[:M, :]
    return out


# -------- stride-1 3x3 conv: taps accumulated on a VMEM-resident row-flat block

def _conv3x3_rowflat_kernel(x_ref, w_ref, t_ref, o_ref, *, kh, kw, dil, Wp, Mo,
                            relu):
    # x_ref: (1, R, Cin) bf16 (padded activation, spatial dims flattened)
    # w_ref: (kh*kw, Cin, tn) bf16 (BN scale folded);  t_ref: (1, tn) f32
    x32 = x_ref[0].astype(jnp.float32)       # robust unaligned sublane slicing
    acc = None
    for di in range(kh):
        for dj in range(kw):
            off = di * dil * Wp + dj * dil
            a2 = x32[off:off + Mo, :].astype(jnp.bfloat16)
            part = jnp.dot(a2, w_ref[di * kw + dj],
                           preferred_element_type=jnp.float32)
            acc = part if acc is None else acc + part
    y = acc + t_ref[...]
    if relu:
        y = jnp.maximum(y, 0.0)
    o_ref[0] = y.astype(o_ref.dtype)


def conv3x3_rowflat_fused(x, w3, shift, dilation=1, padding=1, relu=True):
    """Stride-1 kxk conv with fused BN shift + ReLU, no HBM im2col.
    x: (N,H,W,Cin) bf16;  w3: (kh*kw, Cin, Cout) bf16;  shift: (Cout,) f32."""
    N, H, W, Cin = x.shape
    kk, _, Cout = w3.shape
    kh = kw = int(round(np.sqrt(kk)))
    Hp, Wp = H + 2 * padding, W + 2 * padding
    Ho = Hp - dilation * (kh - 1)
    Wo = Wp - dilation * (kw - 1)
    # one extra zero row at the bottom so wrapped tap reads stay in-bounds
    xp = jnp.pad(x, ((0, 0), (padding, padding + 1), (padding, padding), (0, 0)))
    R = (Hp + 1) * Wp
    x_flat = xp.reshape(N, R, Cin)
    Mo = Ho * Wp                              # Wp-wide rows (junk cols dropped)

    tn = Cout if Cout <= 256 else 256
    assert Cout % tn == 0
    kernel = functools.partial(_conv3x3_rowflat_kernel, kh=kh, kw=kw,
                               dil=dilation, Wp=Wp, Mo=Mo, relu=relu)
    out = pl.pallas_call(
        kernel,
        out_shape=jax.ShapeDtypeStruct((N, Mo, Cout), jnp.bfloat16),
        grid_spec=pltpu.PrefetchScalarGridSpec(
            num_scalar_prefetch=0,
            grid=(N, Cout // tn),
            in_specs=[pl.BlockSpec((1, R, Cin), lambda n, j: (n, 0, 0)),
                      pl.BlockSpec((kh * kw, Cin, tn), lambda n, j: (0, 0, j)),
                      pl.BlockSpec((1, tn), lambda n, j: (0, j))],
            out_specs=pl.BlockSpec((1, Mo, tn), lambda n, j: (n, 0, j))),
        compiler_params=pltpu.CompilerParams(
            dimension_semantics=("parallel", "parallel"),
            vmem_limit_bytes=VMEM_LIMIT),
    )(x_flat, w3, shift.astype(jnp.float32).reshape(1, Cout))
    out = out.reshape(N, Ho, Wp, Cout)[:, :, :Wo, :]
    return out


# -------- 3x3 / stride-2 maxpool via even/odd phase decomposition --------------

def _maxpool_phase_kernel(p00_ref, p01_ref, p10_ref, p11_ref, o_ref, *, Ho, Wo):
    p00 = p00_ref[0].astype(jnp.float32)
    p01 = p01_ref[0].astype(jnp.float32)
    p10 = p10_ref[0].astype(jnp.float32)
    p11 = p11_ref[0].astype(jnp.float32)
    m = p00[:Ho, :Wo, :]
    m = jnp.maximum(m, p00[:Ho, 1:Wo + 1, :])
    m = jnp.maximum(m, p00[1:Ho + 1, :Wo, :])
    m = jnp.maximum(m, p00[1:Ho + 1, 1:Wo + 1, :])
    m = jnp.maximum(m, p01[:Ho, :Wo, :])
    m = jnp.maximum(m, p01[1:Ho + 1, :Wo, :])
    m = jnp.maximum(m, p10[:Ho, :Wo, :])
    m = jnp.maximum(m, p10[:Ho, 1:Wo + 1, :])
    m = jnp.maximum(m, p11[:Ho, :Wo, :])
    o_ref[0] = m.astype(o_ref.dtype)


def maxpool2d_3x3s2(x):
    """x NHWC bf16 -> 3x3/s2/p1 max pool (Pallas, ~1x HBM traffic)."""
    N, H, W, C = x.shape
    assert H % 2 == 0 and W % 2 == 0
    xp = jnp.pad(x, ((0, 0), (1, 1), (1, 1), (0, 0)), constant_values=-3e38)
    Ho, Wo = H // 2, W // 2
    p00 = xp[:, 0::2, 0::2, :]
    p01 = xp[:, 0::2, 1::2, :]
    p10 = xp[:, 1::2, 0::2, :]
    p11 = xp[:, 1::2, 1::2, :]                # each (N, Ho+1, Wo+1, C)
    out = pl.pallas_call(
        functools.partial(_maxpool_phase_kernel, Ho=Ho, Wo=Wo),
        out_shape=jax.ShapeDtypeStruct((N, Ho, Wo, C), x.dtype),
        grid_spec=pltpu.PrefetchScalarGridSpec(
            num_scalar_prefetch=0,
            grid=(N,),
            in_specs=[pl.BlockSpec((1, Ho + 1, Wo + 1, C),
                                   lambda n: (n, 0, 0, 0))] * 4,
            out_specs=pl.BlockSpec((1, Ho, Wo, C), lambda n: (n, 0, 0, 0))),
        compiler_params=pltpu.CompilerParams(
            dimension_semantics=("parallel",),
            vmem_limit_bytes=VMEM_LIMIT),
    )(p00, p01, p10, p11)
    return out


# =============================== conv glue =====================================

def im2col(x, kh, kw, stride, dilation, padding):
    """x NHWC bf16 -> (N*Ho*Wo, kh*kw*C) patches.  Only used for the 3 strided
    convs (7x7 stem + two stride-2 3x3 convs); stride-1 3x3 convs use the
    row-flat Pallas kernel above."""
    N, H, W, C = x.shape
    if padding > 0:
        x = jnp.pad(x, ((0, 0), (padding, padding), (padding, padding), (0, 0)))
    Hp, Wp = x.shape[1], x.shape[2]
    eff_kh = dilation * (kh - 1) + 1
    eff_kw = dilation * (kw - 1) + 1
    Ho = (Hp - eff_kh) // stride + 1
    Wo = (Wp - eff_kw) // stride + 1
    cols = []
    for i in range(kh):
        for j in range(kw):
            patch = x[:, i * dilation: i * dilation + stride * (Ho - 1) + 1: stride,
                         j * dilation: j * dilation + stride * (Wo - 1) + 1: stride, :]
            cols.append(patch)
    patches = jnp.stack(cols, axis=3).reshape(N * Ho * Wo, kh * kw * C)
    return patches, (N, Ho, Wo)


def conv1x1_fused(x, wm, stride=1, shift=None, residual=None, relu=False):
    """1x1 conv as a direct fused matmul.  wm: prepped (Cin, Cout) bf16."""
    Cin, Cout = wm.shape
    if stride > 1:
        x = x[:, ::stride, ::stride, :]
    N, H, W, _ = x.shape
    r2 = residual.reshape(-1, Cout) if residual is not None else None
    y = matmul_fused(x.reshape(-1, Cin), wm, shift=shift, residual=r2, relu=relu)
    return y.reshape(N, H, W, Cout)


def conv2d_im2col_fused(x, wm, kh, kw, stride, padding, dilation, shift, relu):
    """Strided kxk conv via im2col + fused matmul.  wm: prepped (Kp, Cout) bf16."""
    patches, (N, Ho, Wo) = im2col(x, kh, kw, stride, dilation, padding)
    Kp, Cout = wm.shape
    if patches.shape[1] != Kp:
        patches = jnp.pad(patches, ((0, 0), (0, Kp - patches.shape[1])))
    y = matmul_fused(patches, wm, shift=shift, relu=relu)
    return y.reshape(N, Ho, Wo, Cout)


def deconv_s2_fused(x, Wm, shift, Ct, residual=None, out_dtype=jnp.float32):
    """ConvTranspose2d(k=3, s=2, p=1, op=1) via sub-pixel phase decomposition:
    one fused matmul with K=4*Cin, N=4*Ct on the ORIGINAL activations.
    `residual` is a (N,2H,2W,Ct) tensor added inside the matmul epilogue."""
    N, H, W, Cin = x.shape
    xp = jnp.pad(x, ((0, 0), (0, 1), (0, 1), (0, 0)))
    patches = jnp.concatenate([xp[:, di:di + H, dj:dj + W, :]
                               for di in range(2) for dj in range(2)], axis=-1)
    patches = patches.reshape(N * H * W, 4 * Cin)
    r2 = None
    if residual is not None:
        r2 = residual.reshape(N, H, 2, W, 2, Ct).transpose(0, 1, 3, 2, 4, 5)
        r2 = r2.reshape(N * H * W, 4 * Ct)
    y = matmul_fused(patches, Wm, shift=shift, residual=r2, relu=False,
                     out_dtype=out_dtype)
    y = y.reshape(N, H, W, 2, 2, Ct).transpose(0, 1, 3, 2, 4, 5)
    return y.reshape(N, 2 * H, 2 * W, Ct)


def match_sizes_to(target_hw, t):
    """Replicate-pad t (NHWC) bottom/right so its spatial size matches target_hw."""
    dh = target_hw[0] - t.shape[1]
    dw = target_hw[1] - t.shape[2]
    assert dh in (0, 1) and dw in (0, 1), 'invalid padding for skip connection'
    if dh or dw:
        t = jnp.pad(t, ((0, 0), (0, dh), (0, dw), (0, 0)), mode='edge')
    assert t.shape[1] == target_hw[0] and t.shape[2] == target_hw[1], \
        'Shape mismatch after padding'
    return t


# =============================== parameters ====================================

_KEY = [jax.random.PRNGKey(0)]


def _next_key():
    _KEY[0], sub = jax.random.split(_KEY[0])
    return sub


def conv_w(cout, cin, kh, kw):
    fan_in = cin * kh * kw
    return jax.random.normal(_next_key(), (cout, cin, kh, kw), jnp.float32) * np.sqrt(2.0 / fan_in)


def convT_w(cin, cout, kh, kw):
    fan_in = cin * kh * kw
    return jax.random.normal(_next_key(), (cin, cout, kh, kw), jnp.float32) * np.sqrt(1.0 / fan_in)


def bias_p(c):
    return jax.random.normal(_next_key(), (c,), jnp.float32) * 0.01


def bn_p(c):
    return dict(gamma=jnp.ones((c,), jnp.float32), beta=jnp.zeros((c,), jnp.float32),
                mean=jnp.zeros((c,), jnp.float32), var=jnp.ones((c,), jnp.float32))


def make_bottleneck(cin, planes, stride, dilation, has_ds, ds_stride):
    p = {'conv1_w': conv_w(planes, cin, 1, 1), 'bn1': bn_p(planes),
         'conv2_w': conv_w(planes, planes, 3, 3), 'bn2': bn_p(planes),
         'conv2_stride': stride, 'conv2_dil': dilation, 'conv2_pad': dilation,
         'conv3_w': conv_w(planes * 4, planes, 1, 1), 'bn3': bn_p(planes * 4)}
    if has_ds:
        p['ds_w'] = conv_w(planes * 4, cin, 1, 1)
        p['ds_bn'] = bn_p(planes * 4)
        p['ds_stride'] = ds_stride
    return p


def make_layer(cin, planes, blocks, stride):
    layer = [make_bottleneck(cin, planes, stride, 1, True, stride)]
    for _ in range(1, blocks):
        layer.append(make_bottleneck(planes * 4, planes, 1, 1, False, 1))
    return layer


def init_deepercut_params(num_joints):
    p = {'conv1_w': conv_w(64, 3, 7, 7), 'bn1': bn_p(64),
         'layer1': make_layer(64, 64, 3, 1),
         'layer2': make_layer(256, 128, 4, 2),
         'layer3': make_layer(512, 256, 6, 2),
         'layer4': make_layer(1024, 512, 3, 2)}
    # decrease_resnet_backbone_stride (applied to layer4 only):
    p['layer4'][0]['conv2_stride'] = 1
    p['layer4'][0]['ds_stride'] = 1
    for b in p['layer4'][1:]:
        b['conv2_dil'] = 2
        b['conv2_pad'] = 2
    # heads
    p['pd_head_w'] = convT_w(2048, num_joints, 3, 3)
    p['pd_head_b'] = bias_p(num_joints)
    p['lr_head_w'] = convT_w(2048, 2 * num_joints, 3, 3)
    p['lr_head_b'] = bias_p(2 * num_joints)
    p['is_head_w'] = convT_w(1024, num_joints, 3, 3)
    p['is_head_b'] = bias_p(num_joints)
    # skip-connection 1x1 convs
    p['pd_skip_w'] = conv_w(num_joints, 512, 1, 1)
    p['pd_skip_b'] = bias_p(num_joints)
    p['lr_skip_w'] = conv_w(2 * num_joints, 512, 1, 1)
    p['lr_skip_b'] = bias_p(2 * num_joints)
    return p


# ---------------------------- one-time weight preparation ----------------------

def bn_fold(bnp, eps=1e-5):
    scale = bnp['gamma'] * jax.lax.rsqrt(bnp['var'] + eps)
    shift = bnp['beta'] - bnp['mean'] * scale
    return scale, shift


def _prep_1x1(w, scale=None):
    Cout, Cin = w.shape[:2]
    wm = w.reshape(Cout, Cin).T
    if scale is not None:
        wm = wm * scale[None, :]
    return wm.astype(jnp.bfloat16)


def _prep_im2col_w(w, scale=None):
    Cout, Cin, kh, kw = w.shape
    wm = jnp.transpose(w, (2, 3, 1, 0)).reshape(kh * kw * Cin, Cout)
    if scale is not None:
        wm = wm * scale[None, :]
    K = kh * kw * Cin
    Kp = _round_up(K, 128)
    if Kp != K:
        wm = jnp.pad(wm, ((0, Kp - K), (0, 0)))
    return wm.astype(jnp.bfloat16)


def _prep_win_w(w, scale=None):
    Cout, Cin, kh, kw = w.shape
    w4 = jnp.transpose(w, (2, 3, 1, 0))                  # (kh,kw,Cin,Cout)
    if scale is not None:
        w4 = w4 * scale[None, None, None, :]
    return w4.reshape(kh * kw, Cin, Cout).astype(jnp.bfloat16)


def _prep_deconv(w_list, b_list):
    """Build the sub-pixel-phase weight matrix for ConvTranspose2d(k3,s2,p1,op1)."""
    Cin = w_list[0].shape[0]
    couts = [w.shape[1] for w in w_list]
    Ct = sum(couts)
    w_cat = jnp.concatenate(w_list, axis=1)              # (Cin, Ct, 3, 3)

    def kidx(r, d):            # kernel index for output phase r, input offset d
        if r == 0:
            return 1 if d == 0 else None
        return 2 if d == 0 else 0

    Wm = jnp.zeros((4 * Cin, 4 * Ct), jnp.float32)
    for di in range(2):
        for dj in range(2):
            p = di * 2 + dj
            for r in range(2):
                for c in range(2):
                    q = r * 2 + c
                    kh, kw = kidx(r, di), kidx(c, dj)
                    if kh is None or kw is None:
                        continue
                    Wm = Wm.at[p * Cin:(p + 1) * Cin,
                               q * Ct:(q + 1) * Ct].set(w_cat[:, :, kh, kw])
    shift = jnp.tile(jnp.concatenate(b_list), 4).astype(jnp.float32)
    return Wm.astype(jnp.bfloat16), shift, Ct


def prep_bottleneck(p):
    s1, t1 = bn_fold(p['bn1'])
    s2, t2 = bn_fold(p['bn2'])
    s3, t3 = bn_fold(p['bn3'])
    q = {'conv1_w': _prep_1x1(p['conv1_w'], s1), 'conv1_t': t1,
         'conv3_w': _prep_1x1(p['conv3_w'], s3), 'conv3_t': t3,
         'conv2_t': t2,
         'stride': p['conv2_stride'], 'dil': p['conv2_dil'], 'pad': p['conv2_pad']}
    if p['conv2_stride'] == 1:
        q['conv2_w3'] = _prep_win_w(p['conv2_w'], s2)     # row-flat Pallas path
    else:
        q['conv2_wm'] = _prep_im2col_w(p['conv2_w'], s2)  # im2col fallback
    if 'ds_w' in p:
        sd, td = bn_fold(p['ds_bn'])
        q['ds_w'] = _prep_1x1(p['ds_w'], sd)
        q['ds_t'] = td
        q['ds_stride'] = p['ds_stride']
    return q


def prepare_params(params):
    nj = params['pd_head_w'].shape[1]
    s1, t1 = bn_fold(params['bn1'])
    prep = {'num_joints': nj,
            'conv1_wm': _prep_im2col_w(params['conv1_w'], s1),
            'conv1_t': t1}
    for name in ('layer1', 'layer2', 'layer3', 'layer4'):
        prep[name] = [prep_bottleneck(b) for b in params[name]]

    head_ws = [params['pd_head_w']]
    head_bs = [params['pd_head_b']]
    if LOCATION_REFINEMENT:
        head_ws.append(params['lr_head_w'])
        head_bs.append(params['lr_head_b'])
    prep['head_Wm'], prep['head_b'], prep['head_Ct'] = _prep_deconv(head_ws, head_bs)

    if ENABLE_INTERMEDIATE_SUPERVISION:
        prep['is_Wm'], prep['is_b'], prep['is_Ct'] = _prep_deconv(
            [params['is_head_w']], [params['is_head_b']])

    if ENABLE_SKIP_CONNECTIONS:
        skip_ws = [params['pd_skip_w']]
        skip_bs = [params['pd_skip_b']]
        if LOCATION_REFINEMENT:
            skip_ws.append(params['lr_skip_w'])
            skip_bs.append(params['lr_skip_b'])
        prep['skip_w'] = _prep_1x1(jnp.concatenate(skip_ws, axis=0))
        prep['skip_b'] = jnp.concatenate(skip_bs).astype(jnp.float32)
    return prep


# =============================== forward =======================================

def bottleneck_fwd(x, q):
    out = conv1x1_fused(x, q['conv1_w'], shift=q['conv1_t'], relu=True)
    if q['stride'] == 1:
        out = conv3x3_rowflat_fused(out, q['conv2_w3'], q['conv2_t'],
                                    dilation=q['dil'], padding=q['pad'], relu=True)
    else:
        out = conv2d_im2col_fused(out, q['conv2_wm'], kh=3, kw=3,
                                  stride=q['stride'], padding=q['pad'],
                                  dilation=q['dil'], shift=q['conv2_t'], relu=True)
    if 'ds_w' in q:
        identity = conv1x1_fused(x, q['ds_w'], stride=q['ds_stride'],
                                 shift=q['ds_t'], relu=False)
    else:
        identity = x
    # relu(bn3(conv3(out)) + identity) -- residual + relu fused into the matmul
    out = conv1x1_fused(out, q['conv3_w'], shift=q['conv3_t'],
                        residual=identity, relu=True)
    return out


def deepercut_forward(prep, x_nchw):
    x = jnp.transpose(x_nchw, (0, 2, 3, 1)).astype(jnp.bfloat16)    # -> NHWC bf16
    # backbone_to_conv3_bank: conv1, bn1, relu, maxpool, layer1, layer2
    y = conv2d_im2col_fused(x, prep['conv1_wm'], kh=7, kw=7, stride=2, padding=3,
                            dilation=1, shift=prep['conv1_t'], relu=True)
    y = maxpool2d_3x3s2(y)
    for q in prep['layer1']:
        y = bottleneck_fwd(y, q)
    for q in prep['layer2']:
        y = bottleneck_fwd(y, q)
    c3 = y                                                           # 512 ch
    for q in prep['layer3']:
        y = bottleneck_fwd(y, q)
    c4 = y                                                           # 1024 ch
    for q in prep['layer4']:
        y = bottleneck_fwd(y, q)
    c5 = y                                                           # 2048 ch

    nj = prep['num_joints']
    out = {}

    # ----- part-detection (+ locref) heads: fused deconv on c5 ------------------
    residual = None
    if ENABLE_SKIP_CONNECTIONS:
        skip = conv1x1_fused(c3, prep['skip_w'], shift=prep['skip_b'])
        target_hw = (2 * c5.shape[1], 2 * c5.shape[2])
        skip = match_sizes_to(target_hw, skip)
        residual = skip

    heads = deconv_s2_fused(c5, prep['head_Wm'], prep['head_b'], prep['head_Ct'],
                            residual=residual, out_dtype=jnp.float32)
    pd = heads[..., :nj]
    out[DeeperCutHead.part_detection] = jnp.transpose(pd, (0, 3, 1, 2))
    if LOCATION_REFINEMENT:
        lr = heads[..., nj:3 * nj]
        out[DeeperCutHead.locref] = jnp.transpose(lr, (0, 3, 1, 2))

    # ----- intermediate supervision head: deconv on c4 --------------------------
    if ENABLE_INTERMEDIATE_SUPERVISION:
        isr = deconv_s2_fused(c4, prep['is_Wm'], prep['is_b'], prep['is_Ct'],
                              out_dtype=jnp.float32)
        out[DeeperCutHead.intermediate_supervision] = jnp.transpose(isr, (0, 3, 1, 2))
    return out


# =============================== main ==========================================

if __name__ == "__main__":
    num_joints = 4
    raw_params = init_deepercut_params(num_joints)
    prep = prepare_params(raw_params)       # one-time: fold BN, transpose, bf16

    x = jax.random.normal(jax.random.PRNGKey(0), (2, 3, 64, 64), jnp.float32)

    out = deepercut_forward(prep, x)
    out = jax.block_until_ready(out)

    # sanity: part_detection (2, nj, 8, 8); locref (2, 2*nj, 8, 8); inter (2, nj, 8, 8)
    assert out[DeeperCutHead.part_detection].shape == (2, num_joints, 8, 8)
    assert out[DeeperCutHead.locref].shape == (2, 2 * num_joints, 8, 8)
    assert out[DeeperCutHead.intermediate_supervision].shape == (2, num_joints, 8, 8)
    assert all(bool(jnp.all(jnp.isfinite(v))) for v in out.values())

    print("KERNEL_OK")
</pallas_src>

<mosaic_0001>
module attributes {stable_mosaic.version = 11 : i64} {
  func.func @_mm_kernel(%arg0: i32, %arg1: i32, %arg2: i32, %arg3: memref<512x256xbf16, #tpu.memory_space<vmem>>, %arg4: memref<256x64xbf16, #tpu.memory_space<vmem>>, %arg5: memref<1x64xf32, #tpu.memory_space<vmem>>, %arg6: memref<512x64xbf16, #tpu.memory_space<vmem>>) attributes {dimension_semantics = [#tpu.dimension_semantics<parallel>, #tpu.dimension_semantics<parallel>, #tpu.dimension_semantics<arbitrary>], iteration_bounds = array<i64: 4, 1, 1>, scalar_prefetch = 0 : i64, scratch_operands = 0 : i64, tpu.core_type = #tpu.core_type<tc>, window_params = [{transform_indices = @transform_0, window_bounds = array<i64: 512, 256>}, {transform_indices = @transform_1, window_bounds = array<i64: 256, 64>}, {transform_indices = @transform_2, window_bounds = array<i64: 1, 64>}, {transform_indices = @transform_3, window_bounds = array<i64: 512, 64>}]} {
    %c0 = arith.constant 0 : index
    %c0_0 = arith.constant 0 : index
    %0 = vector.load %arg3[%c0, %c0_0] : memref<512x256xbf16, #tpu.memory_space<vmem>>, vector<512x256xbf16>
    %c0_1 = arith.constant 0 : index
    %c0_2 = arith.constant 0 : index
    %1 = vector.load %arg4[%c0_1, %c0_2] : memref<256x64xbf16, #tpu.memory_space<vmem>>, vector<256x64xbf16>
    %cst = arith.constant dense<0.000000e+00> : vector<512x64xf32>
    %2 = tpu.matmul %0, %1, %cst {dimension_numbers = #tpu.dot_dimension_numbers<[1], [0], [0], [1], [0, 0, 1, 1], [], []>} : vector<512x256xbf16>, vector<256x64xbf16>, vector<512x64xf32> -> vector<512x64xf32>
    %c0_3 = arith.constant 0 : index
    %c0_4 = arith.constant 0 : index
    %3 = vector.load %arg5[%c0_3, %c0_4] : memref<1x64xf32, #tpu.memory_space<vmem>>, vector<1x64xf32>
    %4 = vector.broadcast %3 : vector<1x64xf32> to vector<512x64xf32>
    %5 = arith.addf %2, %4 : vector<512x64xf32>
    %cst_5 = arith.constant 0.000000e+00 : f32
    %6 = vector.broadcast %cst_5 : f32 to vector<512x64xf32>
    %7 = arith.maximumf %5, %6 : vector<512x64xf32>
    %8 = arith.truncf %7 : vector<512x64xf32> to vector<512x64xbf16>
    %c0_6 = arith.constant 0 : index
    %c0_7 = arith.constant 0 : index
    %9 = vector.load %arg6[%c0_6, %c0_7] : memref<512x64xbf16, #tpu.memory_space<vmem>>, vector<512x64xbf16>
    tpu.vector_store %arg6[%c0_6, %c0_7], %8 {strides = array<i32>} : memref<512x64xbf16, #tpu.memory_space<vmem>>, vector<512x64xbf16>,
    return
  }
  func.func @transform_0(%arg0: i32, %arg1: i32, %arg2: i32) -> (i32, i32) {
    %c0_i32 = arith.constant 0 : i32
    return %arg0, %arg2 : i32, i32
  }
  func.func @transform_1(%arg0: i32, %arg1: i32, %arg2: i32) -> (i32, i32) {
    %c0_i32 = arith.constant 0 : i32
    return %arg2, %arg1 : i32, i32
  }
  func.func @transform_2(%arg0: i32, %arg1: i32, %arg2: i32) -> (i32, i32) {
    %c0_i32 = arith.constant 0 : i32
    %c0_i32_0 = arith.constant 0 : i32
    return %c0_i32, %arg1 : i32, i32
  }
  func.func @transform_3(%arg0: i32, %arg1: i32, %arg2: i32) -> (i32, i32) {
    %c0_i32 = arith.constant 0 : i32
    return %arg0, %arg1 : i32, i32
  }
}

</mosaic_0001>

<llo_original>
// kernel: tpu_custom_call.1
$region0: #{tpu_custom_call.1}
  #allocation0 [shape = 'u32[]', space=smem, size = 0x4, offset = 0x4, fixed_abs, tag = 'smem constant byte address 0x4 - core index']
  #allocation1 [shape = 'u32[144,128]{1,0:T(1,128)}', space=vmem, size = 0x12000, scoped, tag = 'internal scratch']
  %s0 = inlined_call_operand.hbm [shape: bf16[2048,256], index: 0, kind: input, shape index: {}]
  %s1 = inlined_call_operand.vmem [shape: bf16[256,64], index: 1, kind: input, shape index: {}]
  %s2 = inlined_call_operand.vmem [shape: f32[1,64], index: 2, kind: input, shape index: {}]
  %s3 = inlined_call_operand.vmem [shape: bf16[2048,64], index: 3, kind: output, shape index: {}]
  %s4 = sld [smem:[#allocation0]]
  $region49: #{tpu_custom_call.1} parent=0
    _
  %s6 = ssub.s32 1, %s4
  %s7 = scalar_select 0, %s6, %s4
  $region1: #{tpu_custom_call.1} parent=0
    #allocation2 [shape = 'u8[524288]{0}', space=vmem, size = 0x80000, scoped, tag = 'input window, operand 0']
    #allocation3 [shape = 's32[2]{0}', space=sflag, size = 0x8, scoped, tag = 'scoped memory for tpu_custom_call.1']
    %8 = vsyncpa [#allocation3], 0
    %s9 = scalar_lea.sflag [#allocation3], 1
    %10 = vsyncpa %s9, 0
    loop: start=0, step=1, limit=6
    $region2: #{tpu_custom_call.1} parent=1 // loop_pre_header
      _
    $region3: #{tpu_custom_call.1} parent=1 // loop_header
      %s12 = sphi 0, %s16
      %p13 = scmp.ge.s32.totalorder %s12, 6
      %s19 = sphi 0, %s38
      %s20 = sphi 0, %s34
      %s21 = sphi 0, %s30
      %s22 = sphi 0, %s19
      %s23 = sphi 0, %s20
      %s24 = sphi 0, %s21
      %s25 = sphi 0, %s22
      %s26 = sphi 0, %s23
      %s27 = sphi 0, %s24
      %s43 = sphi 0, %s45
      %s46 = sphi 0, %s43
      %s47 = sphi 0, %s46
      %s63 = sphi 0, %s47
      %s71 = sphi 0, %s73
      %s74 = sphi 0, %s71
      %s75 = sphi 0, %s74
      %s91 = sphi 0, %s75
      %s97 = sphi 0, %s99
      %s100 = sphi 0, %s97
      %s101 = sphi 0, %s100
      %s117 = sphi 0, %s101
      %s125 = sphi 0, %s127
      %s128 = sphi 0, %s125
      %s129 = sphi 0, %s128
      %s145 = sphi 0, %s129
    $region4: #{tpu_custom_call.1} parent=1 // loop_header_branch
      %15 = sbr.rel (%p13) target = $region8
    $region5: #{tpu_custom_call.1} parent=1 // loop_body
      %s17 = ssub.s32 %s12, 1
      %s18 = ssub.s32 %s12, 2
      %s28 = sadd.s32 1, %s21
      %p29 = scmp.ge.s32.totalorder %s28, 1
      %s30 = scalar_select %p29, 0, %s28
      %s31 = sadd.s32 1, %s20
      %s32 = scalar_select %p29, %s31, %s20
      %p33 = scmp.ge.s32.totalorder %s32, 1
      %s34 = scalar_select %p33, 0, %s32
      %s35 = sadd.s32 1, %s19
      %s36 = scalar_select %p33, %s35, %s19
      %p37 = scmp.ge.s32.totalorder %s36, 4
      %s38 = scalar_select %p37, 0, %s36
      %s39 = ssub.s32 %s19, %s38
      %s40 = ssub.s32 %s21, %s30
      %s41 = sor.u32 %s39, %s40
      %p42 = scmp.eq.s32.totalorder %s41, 0
      %s44 = sadd.s32 %s43, 1
      %s45 = scalar_select %p42, %s43, %s44
      %p48 = pneg %p42
      %p49 = scmp.eq.s32.totalorder %s12, 3
      %p50 = por %p48, %p49
      %p51 = scmp.ne.s32.totalorder %s43, %s46
      %p52 = scmp.eq.s32.totalorder %s12, 0
      %p53 = por %p51, %p52
      %p54 = scmp.ne.s32.totalorder %s43, %s46
      %p55 = scmp.eq.s32.totalorder %s17, 3
      %p56 = por %p54, %p55
      %p57 = scmp.ne.s32.totalorder %s46, %s47
      %p58 = scmp.eq.s32.totalorder %s17, 0
      %p59 = por %p57, %p58
      %p60 = scmp.ne.s32.totalorder %s46, %s47
      %p61 = scmp.eq.s32.totalorder %s18, 3
      %p62 = por %p60, %p61
      %p64 = scmp.ne.s32.totalorder %s47, %s63
      %p65 = scmp.eq.s32.totalorder %s18, 0
      %p66 = por %p64, %p65
      %s67 = ssub.s32 %s21, %s30
      %s68 = ssub.s32 %s20, %s34
      %s69 = sor.u32 %s67, %s68
      %p70 = scmp.eq.s32.totalorder %s69, 0
      %s72 = sadd.s32 %s71, 1
      %s73 = scalar_select %p70, %s71, %s72
      %p76 = pneg %p70
      %p77 = scmp.eq.s32.totalorder %s12, 3
      %p78 = por %p76, %p77
      %p79 = scmp.ne.s32.totalorder %s71, %s74
      %p80 = scmp.eq.s32.totalorder %s12, 0
      %p81 = por %p79, %p80
      %p82 = scmp.ne.s32.totalorder %s71, %s74
      %p83 = scmp.eq.s32.totalorder %s17, 3
      %p84 = por %p82, %p83
      %p85 = scmp.ne.s32.totalorder %s74, %s75
      %p86 = scmp.eq.s32.totalorder %s17, 0
      %p87 = por %p85, %p86
      %p88 = scmp.ne.s32.totalorder %s74, %s75
      %p89 = scmp.eq.s32.totalorder %s18, 3
      %p90 = por %p88, %p89
      %p92 = scmp.ne.s32.totalorder %s75, %s91
      %p93 = scmp.eq.s32.totalorder %s18, 0
      %p94 = por %p92, %p93
      %s95 = ssub.s32 %s20, %s34
      %p96 = scmp.eq.s32.totalorder %s95, 0
      %s98 = sadd.s32 %s97, 1
      %s99 = scalar_select %p96, %s97, %s98
      %p102 = pneg %p96
      %p103 = scmp.eq.s32.totalorder %s12, 3
      %p104 = por %p102, %p103
      %p105 = scmp.ne.s32.totalorder %s97, %s100
      %p106 = scmp.eq.s32.totalorder %s12, 0
      %p107 = por %p105, %p106
      %p108 = scmp.ne.s32.totalorder %s97, %s100
      %p109 = scmp.eq.s32.totalorder %s17, 3
      %p110 = por %p108, %p109
      %p111 = scmp.ne.s32.totalorder %s100, %s101
      %p112 = scmp.eq.s32.totalorder %s17, 0
      %p113 = por %p111, %p112
      %p114 = scmp.ne.s32.totalorder %s100, %s101
      %p115 = scmp.eq.s32.totalorder %s18, 3
      %p116 = por %p114, %p115
      %p118 = scmp.ne.s32.totalorder %s101, %s117
      %p119 = scmp.eq.s32.totalorder %s18, 0
      %p120 = por %p118, %p119
      %s121 = ssub.s32 %s19, %s38
      %s122 = ssub.s32 %s20, %s34
      %s123 = sor.u32 %s121, %s122
      %p124 = scmp.eq.s32.totalorder %s123, 0
      %s126 = sadd.s32 %s125, 1
      %s127 = scalar_select %p124, %s125, %s126
      %p130 = pneg %p124
      %p131 = scmp.eq.s32.totalorder %s12, 3
      %p132 = por %p130, %p131
      %p133 = scmp.ne.s32.totalorder %s125, %s128
      %p134 = scmp.eq.s32.totalorder %s12, 0
      %p135 = por %p133, %p134
      %p136 = scmp.ne.s32.totalorder %s125, %s128
      %p137 = scmp.eq.s32.totalorder %s17, 3
      %p138 = por %p136, %p137
      %p139 = scmp.ne.s32.totalorder %s128, %s129
      %p140 = scmp.eq.s32.totalorder %s17, 0
      %p141 = por %p139, %p140
      %p142 = scmp.ne.s32.totalorder %s128, %s129
      %p143 = scmp.eq.s32.totalorder %s18, 3
      %p144 = por %p142, %p143
      %p146 = scmp.ne.s32.totalorder %s129, %s145
      %p147 = scmp.eq.s32.totalorder %s18, 0
      %p148 = por %p146, %p147
      %p149 = scmp.le.s32.totalorder 1, %s12
      %p150 = scmp.lt.s32.totalorder %s12, 5
      %p151 = pnand %p149, %p150
      %p152 = pneg %p151
      // Predicated region
      $region9: #{tpu_custom_call.1} parent=5 // pred_check
        _
      $region10: #{tpu_custom_call.1} parent=5 // pred_check_branch
        %154 = sbr.rel (%p151) target = $region12
      $region11: #{tpu_custom_call.1} parent=5 // pred_region
        %s155 = ssub.s32 %s12, 1
        // Predicated region
        $region13: #{tpu_custom_call.1} parent=11 // pred_check
          %p156 = pneg %p87
        $region14: #{tpu_custom_call.1} parent=11 // pred_check_branch
          %158 = sbr.rel (%p156) target = $region16
        $region15: #{tpu_custom_call.1} parent=11 // pred_region
          %s159 = smul.u32 32, %s24
          %p160 = scmp.lt.s32.totalorder %s159, 31
          %s161 = scalar_select %p160, %s159, 31
          %p162 = scmp.lt.s32.totalorder %s23, 0
          %s163 = scalar_select %p162, %s23, 0
          %s164 = sadd.s32 %s163, %s161
          %s165 = smul.addr %s164, 4
          %s166 = scalar_lea.vmem %s1, %s165
          %s167 = smul.u32 32, %s24
        $region16: #{tpu_custom_call.1} parent=11 // pred_fallthru
          _
        // Predicated region
        $region17: #{tpu_custom_call.1} parent=11 // pred_check
          %p168 = pneg %p113
        $region18: #{tpu_custom_call.1} parent=11 // pred_check_branch
          %170 = sbr.rel (%p168) target = $region20
        $region19: #{tpu_custom_call.1} parent=11 // pred_region
          %p171 = scmp.lt.s32.totalorder %s23, 0
          %s172 = scalar_select %p171, %s23, 0
          %s173 = scalar_lea.vmem %s2, %s172
        $region20: #{tpu_custom_call.1} parent=11 // pred_fallthru
          _
      $region12: #{tpu_custom_call.1} parent=5 // pred_fallthru
        _
      %p174 = scmp.lt.s32.totalorder %s12, 4
      // Predicated region
      $region21: #{tpu_custom_call.1} parent=5 // pred_check
        %p175 = pneg %p174
      $region22: #{tpu_custom_call.1} parent=5 // pred_check_branch
        %177 = sbr.rel (%p175) target = $region24
      $region23: #{tpu_custom_call.1} parent=5 // pred_region
        // Predicated region
        $region25: #{tpu_custom_call.1} parent=23 // pred_check
          %p178 = pneg %p53
        $region26: #{tpu_custom_call.1} parent=23 // pred_check_branch
          %180 = sbr.rel (%p178) target = $region28
        $region27: #{tpu_custom_call.1} parent=23 // pred_region
          %s181 = sand.u32 %s43, 1
          %s182 = scalar_lea.sflag [#allocation3], %s181
          %s183 = sand.u32 %s43, 1
          %s184 = smul.addr %s183, 512
          %s185 = scalar_lea.vmem [#allocation2], %s184
          %s186 = smul.u32 64, %s19
          %s187 = smul.u32 2, %s21
          %s189 = ssub.s32 8192, 8192
          %190 = vsyncadd %s182, %s189
          %s191 = smul.addr %s186, 2
          %s192 = sadd.s32 %s187, %s191
          %s193 = smul.addr %s192, 64
          %s194 = scalar_lea.hbm %s0, %s193
          %s195 = sshll.u32 %s185, 4
          %s196 = int_to_ptr.vmem [resolvable:$true] %s195
          %201 = dma.hbm_to_vmem [thread:$0]  %s194, 8192, %s196, %s182, 128, 128, 8
        $region28: #{tpu_custom_call.1} parent=23 // pred_fallthru
          _
      $region24: #{tpu_custom_call.1} parent=5 // pred_fallthru
        _
      %p202 = scmp.le.s32.totalorder 1, %s12
      %p203 = scmp.lt.s32.totalorder %s12, 5
      %p204 = pnand %p202, %p203
      %p205 = pneg %p204
      // Predicated region
      $region29: #{tpu_custom_call.1} parent=5 // pred_check
        _
      $region30: #{tpu_custom_call.1} parent=5 // pred_check_branch
        %207 = sbr.rel (%p204) target = $region32
      $region31: #{tpu_custom_call.1} parent=5 // pred_region
        %s208 = ssub.s32 %s12, 1
        %s209 = sand.u32 %s46, 1
        %s210 = scalar_lea.sflag [#allocation3], %s209
        %s211 = sand.u32 %s46, 1
        %s212 = smul.addr %s211, 512
        %s213 = scalar_lea.vmem [#allocation2], %s212
        // Predicated region
        $region33: #{tpu_custom_call.1} parent=31 // pred_check
          %p214 = pneg %p59
        $region34: #{tpu_custom_call.1} parent=31 // pred_check_branch
          %216 = sbr.rel (%p214) target = $region36
        $region35: #{tpu_custom_call.1} parent=31 // pred_region
          %217 = dma.done %s210, 8192
        $region36: #{tpu_custom_call.1} parent=31 // pred_fallthru
          _
        %s218 = sand.u32 %s46, 1
        %s219 = scalar_lea.sflag [#allocation3], %s218
        %s220 = sand.u32 %s46, 1
        %s221 = smul.addr %s220, 512
        %s222 = scalar_lea.vmem [#allocation2], %s221
        %p223 = pneg %p59
        %p224 = pneg %p56
        %s225 = smul.u32 32, %s24
        %p226 = scmp.lt.s32.totalorder %s225, 31
        %s227 = scalar_select %p226, %s225, 31
        %p228 = scmp.lt.s32.totalorder %s23, 0
        %s229 = scalar_select %p228, %s23, 0
        %s230 = sadd.s32 %s229, %s227
        %s231 = smul.addr %s230, 4
        %s232 = scalar_lea.vmem %s1, %s231
        %p233 = pneg %p87
        %p234 = pneg %p84
        %p235 = scmp.lt.s32.totalorder %s23, 0
        %s236 = scalar_select %p235, %s23, 0
        %s237 = scalar_lea.vmem %s2, %s236
        %p238 = pneg %p113
        %p239 = pneg %p110
        %p240 = pneg %p141
        %p241 = pneg %p138
        %s242 = smul.u32 64, %s22
        %p243 = scmp.lt.s32.totalorder %s242, 255
        %s244 = scalar_select %p243, %s242, 255
        %p245 = scmp.lt.s32.totalorder %s23, 0
        %s246 = scalar_select %p245, %s23, 0
        %s247 = sadd.s32 %s246, %s244
        %s248 = smul.addr %s247, 4
        %s249 = scalar_lea.vmem %s3, %s248
        %s250 = smul.u32 64, %s22
        %s251 = smul.u32 2, %s24
        %s252 = smul.u32 32, %s24
        %p253 = scmp.lt.s32.totalorder %s252, 31
        %s254 = scalar_select %p253, %s252, 31
        %p255 = scmp.lt.s32.totalorder %s23, 0
        %s256 = scalar_select %p255, %s23, 0
        %s257 = sadd.s32 %s256, %s254
        %s258 = smul.addr %s257, 4
        %s259 = scalar_lea.vmem %s1, %s258
        %s260 = smul.u32 32, %s24
        %p261 = scmp.lt.s32.totalorder %s23, 0
        %s262 = scalar_select %p261, %s23, 0
        %s263 = scalar_lea.vmem %s2, %s262
        %s264 = smul.u32 64, %s22
        %p265 = scmp.lt.s32.totalorder %s264, 255
        %s266 = scalar_select %p265, %s264, 255
        %p267 = scmp.lt.s32.totalorder %s23, 0
        %s268 = scalar_select %p267, %s23, 0
        %s269 = sadd.s32 %s268, %s266
        %s270 = smul.addr %s269, 4
        %s271 = scalar_lea.vmem %s3, %s270
        %s272 = smul.u32 64, %s22
        %v274 = vld [vmem:[%s213] sm:$0xff]
        %v275 = vld [vmem:[%s213 + $0x8] sm:$0xff]
        %v276 = vld [vmem:[%s213 + $0x10] sm:$0xff]
        %v277 = vld [vmem:[%s213 + $0x18] sm:$0xff]
        %v278 = vld [vmem:[%s213 + $0x20] sm:$0xff]
        %v279 = vld [vmem:[%s213 + $0x28] sm:$0xff]
        %v280 = vld [vmem:[%s213 + $0x30] sm:$0xff]
        %v281 = vld [vmem:[%s213 + $0x38] sm:$0xff]
        %v282 = vld [vmem:[%s213 + $0x40] sm:$0xff]
        %v283 = vld [vmem:[%s213 + $0x48] sm:$0xff]
        %v284 = vld [vmem:[%s213 + $0x50] sm:$0xff]
        %v285 = vld [vmem:[%s213 + $0x58] sm:$0xff]
        %v286 = vld [vmem:[%s213 + $0x60] sm:$0xff]
        %v287 = vld [vmem:[%s213 + $0x68] sm:$0xff]
        %v288 = vld [vmem:[%s213 + $0x70] sm:$0xff]
        %v289 = vld [vmem:[%s213 + $0x78] sm:$0xff]
        %v290 = vld [vmem:[%s213 + $0x80] sm:$0xff]
        %v291 = vld [vmem:[%s213 + $0x88] sm:$0xff]
        %v292 = vld [vmem:[%s213 + $0x90] sm:$0xff]
        %v293 = vld [vmem:[%s213 + $0x98] sm:$0xff]
        %v294 = vld [vmem:[%s213 + $0xa0] sm:$0xff]
        %v295 = vld [vmem:[%s213 + $0xa8] sm:$0xff]
        %v296 = vld [vmem:[%s213 + $0xb0] sm:$0xff]
        %v297 = vld [vmem:[%s213 + $0xb8] sm:$0xff]
        %v298 = vld [vmem:[%s213 + $0xc0] sm:$0xff]
        %v299 = vld [vmem:[%s213 + $0xc8] sm:$0xff]
        %v300 = vld [vmem:[%s213 + $0xd0] sm:$0xff]
        %v301 = vld [vmem:[%s213 + $0xd8] sm:$0xff]
        %v302 = vld [vmem:[%s213 + $0xe0] sm:$0xff]
        %v303 = vld [vmem:[%s213 + $0xe8] sm:$0xff]
        %v304 = vld [vmem:[%s213 + $0xf0] sm:$0xff]
        %v305 = vld [vmem:[%s213 + $0xf8] sm:$0xff]
        %v306 = vld [vmem:[%s213 + $0x100] sm:$0xff]
        %v307 = vld [vmem:[%s213 + $0x108] sm:$0xff]
        %v308 = vld [vmem:[%s213 + $0x110] sm:$0xff]
        %v309 = vld [vmem:[%s213 + $0x118] sm:$0xff]
        %v310 = vld [vmem:[%s213 + $0x120] sm:$0xff]
        %v311 = vld [vmem:[%s213 + $0x128] sm:$0xff]
        %v312 = vld [vmem:[%s213 + $0x130] sm:$0xff]
        %v313 = vld [vmem:[%s213 + $0x138] sm:$0xff]
        %v314 = vld [vmem:[%s213 + $0x140] sm:$0xff]
        %v315 = vld [vmem:[%s213 + $0x148] sm:$0xff]
        %v316 = vld [vmem:[%s213 + $0x150] sm:$0xff]
        %v317 = vld [vmem:[%s213 + $0x158] sm:$0xff]
        %v318 = vld [vmem:[%s213 + $0x160] sm:$0xff]
        %v319 = vld [vmem:[%s213 + $0x168] sm:$0xff]
        %v320 = vld [vmem:[%s213 + $0x170] sm:$0xff]
        %v321 = vld [vmem:[%s213 + $0x178] sm:$0xff]
        %v322 = vld [vmem:[%s213 + $0x180] sm:$0xff]
        %v323 = vld [vmem:[%s213 + $0x188] sm:$0xff]
        %v324 = vld [vmem:[%s213 + $0x190] sm:$0xff]
        %v325 = vld [vmem:[%s213 + $0x198] sm:$0xff]
        %v326 = vld [vmem:[%s213 + $0x1a0] sm:$0xff]
        %v327 = vld [vmem:[%s213 + $0x1a8] sm:$0xff]
        %v328 = vld [vmem:[%s213 + $0x1b0] sm:$0xff]
        %v329 = vld [vmem:[%s213 + $0x1b8] sm:$0xff]
        %v330 = vld [vmem:[%s213 + $0x1c0] sm:$0xff]
        %v331 = vld [vmem:[%s213 + $0x1c8] sm:$0xff]
        %v332 = vld [vmem:[%s213 + $0x1d0] sm:$0xff]
        %v333 = vld [vmem:[%s213 + $0x1d8] sm:$0xff]
        %v334 = vld [vmem:[%s213 + $0x1e0] sm:$0xff]
        %v335 = vld [vmem:[%s213 + $0x1e8] sm:$0xff]
        %v336 = vld [vmem:[%s213 + $0x1f0] sm:$0xff]
        %v337 = vld [vmem:[%s213 + $0x1f8] sm:$0xff]
        %v338 = vld [vmem:[%s259] sm:$0xf]
        %v339 = vld [vmem:[%s259 + $0x4] sm:$0xf]
        %v340 = vld [vmem:[%s259 + $0x8] sm:$0xf]
        %v341 = vld [vmem:[%s259 + $0xc] sm:$0xf]
        %v342 = vld [vmem:[%s259 + $0x10] sm:$0xf]
        %v343 = vld [vmem:[%s259 + $0x14] sm:$0xf]
        %v344 = vld [vmem:[%s259 + $0x18] sm:$0xf]
        %v345 = vld [vmem:[%s259 + $0x1c] sm:$0xf]
        %v346 = vld [vmem:[%s259 + $0x20] sm:$0xf]
        %v347 = vld [vmem:[%s259 + $0x24] sm:$0xf]
        %v348 = vld [vmem:[%s259 + $0x28] sm:$0xf]
        %v349 = vld [vmem:[%s259 + $0x2c] sm:$0xf]
        %v350 = vld [vmem:[%s259 + $0x30] sm:$0xf]
        %v351 = vld [vmem:[%s259 + $0x34] sm:$0xf]
        %v352 = vld [vmem:[%s259 + $0x38] sm:$0xf]
        %v353 = vld [vmem:[%s259 + $0x3c] sm:$0xf]
        %v354 = vld [vmem:[%s259 + $0x40] sm:$0xf]
        %v355 = vld [vmem:[%s259 + $0x44] sm:$0xf]
        %v356 = vld [vmem:[%s259 + $0x48] sm:$0xf]
        %v357 = vld [vmem:[%s259 + $0x4c] sm:$0xf]
        %v358 = vld [vmem:[%s259 + $0x50] sm:$0xf]
        %v359 = vld [vmem:[%s259 + $0x54] sm:$0xf]
        %v360 = vld [vmem:[%s259 + $0x58] sm:$0xf]
        %v361 = vld [vmem:[%s259 + $0x5c] sm:$0xf]
        %v362 = vld [vmem:[%s259 + $0x60] sm:$0xf]
        %v363 = vld [vmem:[%s259 + $0x64] sm:$0xf]
        %v364 = vld [vmem:[%s259 + $0x68] sm:$0xf]
        %v365 = vld [vmem:[%s259 + $0x6c] sm:$0xf]
        %v366 = vld [vmem:[%s259 + $0x70] sm:$0xf]
        %v367 = vld [vmem:[%s259 + $0x74] sm:$0xf]
        %v368 = vld [vmem:[%s259 + $0x78] sm:$0xf]
        %v369 = vld [vmem:[%s259 + $0x7c] sm:$0xf]
        %v370 = vld [vmem:[%s263] sm:$0x1]
        %v372 = vlaneseq
        %v373 = vshrl.u32 %v372, 7
        %v374 = vsub.s32 0, %v373
        %v375 = vrot.slane %v370, %v374
        %v441 = vunpack.c.l.b16 %v274
        %v442 = vunpack.c.h.b16 %v274
        %v443 = vunpack.c.l.b16 %v275
        %v444 = vunpack.c.h.b16 %v275
        %v445 = vunpack.c.l.b16 %v276
        %v446 = vunpack.c.h.b16 %v276
        %v447 = vunpack.c.l.b16 %v277
        %v448 = vunpack.c.h.b16 %v277
        %v449 = vunpack.c.l.b16 %v278
        %v450 = vunpack.c.h.b16 %v278
        %v451 = vunpack.c.l.b16 %v279
        %v452 = vunpack.c.h.b16 %v279
        %v453 = vunpack.c.l.b16 %v280
        %v454 = vunpack.c.h.b16 %v280
        %v455 = vunpack.c.l.b16 %v281
        %v456 = vunpack.c.h.b16 %v281
        %v457 = vunpack.c.l.b16 %v282
        %v458 = vunpack.c.h.b16 %v282
        %v459 = vunpack.c.l.b16 %v283
        %v460 = vunpack.c.h.b16 %v283
        %v461 = vunpack.c.l.b16 %v284
        %v462 = vunpack.c.h.b16 %v284
        %v463 = vunpack.c.l.b16 %v285
        %v464 = vunpack.c.h.b16 %v285
        %v465 = vunpack.c.l.b16 %v286
        %v466 = vunpack.c.h.b16 %v286
        %v467 = vunpack.c.l.b16 %v287
        %v468 = vunpack.c.h.b16 %v287
        %v469 = vunpack.c.l.b16 %v288
        %v470 = vunpack.c.h.b16 %v288
        %v471 = vunpack.c.l.b16 %v289
        %v472 = vunpack.c.h.b16 %v289
        %v473 = vunpack.c.l.b16 %v290
        %v474 = vunpack.c.h.b16 %v290
        %v475 = vunpack.c.l.b16 %v291
        %v476 = vunpack.c.h.b16 %v291
        %v477 = vunpack.c.l.b16 %v292
        %v478 = vunpack.c.h.b16 %v292
        %v479 = vunpack.c.l.b16 %v293
        %v480 = vunpack.c.h.b16 %v293
        %v481 = vunpack.c.l.b16 %v294
        %v482 = vunpack.c.h.b16 %v294
        %v483 = vunpack.c.l.b16 %v295
        %v484 = vunpack.c.h.b16 %v295
        %v485 = vunpack.c.l.b16 %v296
        %v486 = vunpack.c.h.b16 %v296
        %v487 = vunpack.c.l.b16 %v297
        %v488 = vunpack.c.h.b16 %v297
        %v489 = vunpack.c.l.b16 %v298
        %v490 = vunpack.c.h.b16 %v298
        %v491 = vunpack.c.l.b16 %v299
        %v492 = vunpack.c.h.b16 %v299
        %v493 = vunpack.c.l.b16 %v300
        %v494 = vunpack.c.h.b16 %v300
        %v495 = vunpack.c.l.b16 %v301
        %v496 = vunpack.c.h.b16 %v301
        %v497 = vunpack.c.l.b16 %v302
        %v498 = vunpack.c.h.b16 %v302
        %v499 = vunpack.c.l.b16 %v303
        %v500 = vunpack.c.h.b16 %v303
        %v501 = vunpack.c.l.b16 %v304
        %v502 = vunpack.c.h.b16 %v304
        %v503 = vunpack.c.l.b16 %v305
        %v504 = vunpack.c.h.b16 %v305
        %v505 = vunpack.c.l.b16 %v306
        %v506 = vunpack.c.h.b16 %v306
        %v507 = vunpack.c.l.b16 %v307
        %v508 = vunpack.c.h.b16 %v307
        %v509 = vunpack.c.l.b16 %v308
        %v510 = vunpack.c.h.b16 %v308
        %v511 = vunpack.c.l.b16 %v309
        %v512 = vunpack.c.h.b16 %v309
        %v513 = vunpack.c.l.b16 %v310
        %v514 = vunpack.c.h.b16 %v310
        %v515 = vunpack.c.l.b16 %v311
        %v516 = vunpack.c.h.b16 %v311
        %v517 = vunpack.c.l.b16 %v312
        %v518 = vunpack.c.h.b16 %v312
        %v519 = vunpack.c.l.b16 %v313
        %v520 = vunpack.c.h.b16 %v313
        %v521 = vunpack.c.l.b16 %v314
        %v522 = vunpack.c.h.b16 %v314
        %v523 = vunpack.c.l.b16 %v315
        %v524 = vunpack.c.h.b16 %v315
        %v525 = vunpack.c.l.b16 %v316
        %v526 = vunpack.c.h.b16 %v316
        %v527 = vunpack.c.l.b16 %v317
        %v528 = vunpack.c.h.b16 %v317
        %v529 = vunpack.c.l.b16 %v318
        %v530 = vunpack.c.h.b16 %v318
        %v531 = vunpack.c.l.b16 %v319
        %v532 = vunpack.c.h.b16 %v319
        %v533 = vunpack.c.l.b16 %v320
        %v534 = vunpack.c.h.b16 %v320
        %v535 = vunpack.c.l.b16 %v321
        %v536 = vunpack.c.h.b16 %v321
        %v537 = vunpack.c.l.b16 %v322
        %v538 = vunpack.c.h.b16 %v322
        %v539 = vunpack.c.l.b16 %v323
        %v540 = vunpack.c.h.b16 %v323
        %v541 = vunpack.c.l.b16 %v324
        %v542 = vunpack.c.h.b16 %v324
        %v543 = vunpack.c.l.b16 %v325
        %v544 = vunpack.c.h.b16 %v325
        %v545 = vunpack.c.l.b16 %v326
        %v546 = vunpack.c.h.b16 %v326
        %v547 = vunpack.c.l.b16 %v327
        %v548 = vunpack.c.h.b16 %v327
        %v549 = vunpack.c.l.b16 %v328
        %v550 = vunpack.c.h.b16 %v328
        %v551 = vunpack.c.l.b16 %v329
        %v552 = vunpack.c.h.b16 %v329
        %v553 = vunpack.c.l.b16 %v330
        %v554 = vunpack.c.h.b16 %v330
        %v555 = vunpack.c.l.b16 %v331
        %v556 = vunpack.c.h.b16 %v331
        %v557 = vunpack.c.l.b16 %v332
        %v558 = vunpack.c.h.b16 %v332
        %v559 = vunpack.c.l.b16 %v333
        %v560 = vunpack.c.h.b16 %v333
        %v561 = vunpack.c.l.b16 %v334
        %v562 = vunpack.c.h.b16 %v334
        %v563 = vunpack.c.l.b16 %v335
        %v564 = vunpack.c.h.b16 %v335
        %v565 = vunpack.c.l.b16 %v336
        %v566 = vunpack.c.h.b16 %v336
        %v567 = vunpack.c.l.b16 %v337
        %v568 = vunpack.c.h.b16 %v337
        %v569 = vpack.c.b16 %v443, %v441
        %v570 = vpack.c.b16 %v444, %v442
        %v571 = vpack.c.b16 %v447, %v445
        %v572 = vpack.c.b16 %v448, %v446
        %v573 = vpack.c.b16 %v451, %v449
        %v574 = vpack.c.b16 %v452, %v450
        %v575 = vpack.c.b16 %v455, %v453
        %v576 = vpack.c.b16 %v456, %v454
        %v577 = vpack.c.b16 %v459, %v457
        %v578 = vpack.c.b16 %v460, %v458
        %v579 = vpack.c.b16 %v463, %v461
        %v580 = vpack.c.b16 %v464, %v462
        %v581 = vpack.c.b16 %v467, %v465
        %v582 = vpack.c.b16 %v468, %v466
        %v583 = vpack.c.b16 %v471, %v469
        %v584 = vpack.c.b16 %v472, %v470
        %v585 = vpack.c.b16 %v475, %v473
        %v586 = vpack.c.b16 %v476, %v474
        %v587 = vpack.c.b16 %v479, %v477
        %v588 = vpack.c.b16 %v480, %v478
        %v589 = vpack.c.b16 %v483, %v481
        %v590 = vpack.c.b16 %v484, %v482
        %v591 = vpack.c.b16 %v487, %v485
        %v592 = vpack.c.b16 %v488, %v486
        %v593 = vpack.c.b16 %v491, %v489
        %v594 = vpack.c.b16 %v492, %v490
        %v595 = vpack.c.b16 %v495, %v493
        %v596 = vpack.c.b16 %v496, %v494
        %v597 = vpack.c.b16 %v499, %v497
        %v598 = vpack.c.b16 %v500, %v498
        %v599 = vpack.c.b16 %v503, %v501
        %v600 = vpack.c.b16 %v504, %v502
        %v601 = vpack.c.b16 %v507, %v505
        %v602 = vpack.c.b16 %v508, %v506
        %v603 = vpack.c.b16 %v511, %v509
        %v604 = vpack.c.b16 %v512, %v510
        %v605 = vpack.c.b16 %v515, %v513
        %v606 = vpack.c.b16 %v516, %v514
        %v607 = vpack.c.b16 %v519, %v517
        %v608 = vpack.c.b16 %v520, %v518
        %v609 = vpack.c.b16 %v523, %v521
        %v610 = vpack.c.b16 %v524, %v522
        %v611 = vpack.c.b16 %v527, %v525
        %v612 = vpack.c.b16 %v528, %v526
        %v613 = vpack.c.b16 %v531, %v529
        %v614 = vpack.c.b16 %v532, %v530
        %v615 = vpack.c.b16 %v535, %v533
        %v616 = vpack.c.b16 %v536, %v534
        %v617 = vpack.c.b16 %v539, %v537
        %v618 = vpack.c.b16 %v540, %v538
        %v619 = vpack.c.b16 %v543, %v541
        %v620 = vpack.c.b16 %v544, %v542
        %v621 = vpack.c.b16 %v547, %v545
        %v622 = vpack.c.b16 %v548, %v546
        %v623 = vpack.c.b16 %v551, %v549
        %v624 = vpack.c.b16 %v552, %v550
        %v625 = vpack.c.b16 %v555, %v553
        %v626 = vpack.c.b16 %v556, %v554
        %v627 = vpack.c.b16 %v559, %v557
        %v628 = vpack.c.b16 %v560, %v558
        %v629 = vpack.c.b16 %v563, %v561
        %v630 = vpack.c.b16 %v564, %v562
        %v631 = vpack.c.b16 %v567, %v565
        %v632 = vpack.c.b16 %v568, %v566
        %v729 = vunpack.c.l.b16 %v338
        %v730 = vunpack.c.l.b16 %v339
        %v731 = vunpack.c.l.b16 %v340
        %v732 = vunpack.c.l.b16 %v341
        %v733 = vunpack.c.l.b16 %v342
        %v734 = vunpack.c.l.b16 %v343
        %v735 = vunpack.c.l.b16 %v344
        %v736 = vunpack.c.l.b16 %v345
        %v737 = vunpack.c.l.b16 %v346
        %v738 = vunpack.c.l.b16 %v347
        %v739 = vunpack.c.l.b16 %v348
        %v740 = vunpack.c.l.b16 %v349
        %v741 = vunpack.c.l.b16 %v350
        %v742 = vunpack.c.l.b16 %v351
        %v743 = vunpack.c.l.b16 %v352
        %v744 = vunpack.c.l.b16 %v353
        %v745 = vunpack.c.l.b16 %v354
        %v746 = vunpack.c.l.b16 %v355
        %v747 = vunpack.c.l.b16 %v356
        %v748 = vunpack.c.l.b16 %v357
        %v749 = vunpack.c.l.b16 %v358
        %v750 = vunpack.c.l.b16 %v359
        %v751 = vunpack.c.l.b16 %v360
        %v752 = vunpack.c.l.b16 %v361
        %v753 = vunpack.c.l.b16 %v362
        %v754 = vunpack.c.l.b16 %v363
        %v755 = vunpack.c.l.b16 %v364
        %v756 = vunpack.c.l.b16 %v365
        %v757 = vunpack.c.l.b16 %v366
        %v758 = vunpack.c.l.b16 %v367
        %v759 = vunpack.c.l.b16 %v368
        %v760 = vunpack.c.l.b16 %v369
        %v761 = vpack.c.b16 %v730, %v729
        %v762 = vpack.c.b16 %v732, %v731
        %v763 = vpack.c.b16 %v734, %v733
        %v764 = vpack.c.b16 %v736, %v735
        %v765 = vpack.c.b16 %v738, %v737
        %v766 = vpack.c.b16 %v740, %v739
        %v767 = vpack.c.b16 %v742, %v741
        %v768 = vpack.c.b16 %v744, %v743
        %v769 = vpack.c.b16 %v746, %v745
        %v770 = vpack.c.b16 %v748, %v747
        %v771 = vpack.c.b16 %v750, %v749
        %v772 = vpack.c.b16 %v752, %v751
        %v773 = vpack.c.b16 %v754, %v753
        %v774 = vpack.c.b16 %v756, %v755
        %v775 = vpack.c.b16 %v758, %v757
        %v776 = vpack.c.b16 %v760, %v759
        %793 = vmatprep.subr.bf16.mxu0 0
        %794 = vmatpush1.bf16.msra.mxu0 %v768
        %795 = vmatprep.subr.bf16.mxu0 0
        %796 = vmatpush1.bf16.msra.mxu0 %v767
        %797 = vmatprep.subr.bf16.mxu0 0
        %798 = vmatpush1.bf16.msra.mxu0 %v766
        %799 = vmatprep.subr.bf16.mxu0 0
        %800 = vmatpush1.bf16.msra.mxu0 %v765
        %801 = vmatprep.subr.bf16.mxu0 0
        %802 = vmatpush1.bf16.msra.mxu0 %v764
        %803 = vmatprep.subr.bf16.mxu0 0
        %804 = vmatpush1.bf16.msra.mxu0 %v763
        %805 = vmatprep.subr.bf16.mxu0 0
        %806 = vmatpush1.bf16.msra.mxu0 %v762
        %807 = vmatprep.subr.bf16.mxu0 0
        %808 = vmatpush1.bf16.msra.mxu0 %v761
        %809 = vmatprep.subr.bf16.mxu0 0
        %810 = vmatpush2.bf16.msra.mxu0 %v776
        %811 = vmatprep.subr.bf16.mxu0 0
        %812 = vmatpush2.bf16.msra.mxu0 %v775
        %813 = vmatprep.subr.bf16.mxu0 0
        %814 = vmatpush2.bf16.msra.mxu0 %v774
        %815 = vmatprep.subr.bf16.mxu0 0
        %816 = vmatpush2.bf16.msra.mxu0 %v773
        %817 = vmatprep.subr.bf16.mxu0 0
        %818 = vmatpush2.bf16.msra.mxu0 %v772
        %819 = vmatprep.subr.bf16.mxu0 0
        %820 = vmatpush2.bf16.msra.mxu0 %v771
        %821 = vmatprep.subr.bf16.mxu0 0
        %822 = vmatpush2.bf16.msra.mxu0 %v770
        %823 = vmatprep.subr.bf16.mxu0 0
        %824 = vmatpush2.bf16.msra.mxu0 %v769
        %825 = vmatprep.mubr.bf16.mxu0 %v570
        %826 = vmatmul.mubr.bf16.gmra.mxu0 %v569
        %v827 = vpop.f32.mrf.mxu0
        %v828 = vadd.f32 %v375, %v827
        %v829 = vpop.f32.mrf.mxu0
        %v830 = vpop.f32.mrf.mxu0
        %v831 = vadd.f32 %v375, %v830
        %v832 = vpop.f32.mrf.mxu0
        %833 = vmatprep.mubr.bf16.mxu0 %v572
        %834 = vmatmul.mubr.bf16.gmra.mxu0 %v571
        %v835 = vpop.f32.mrf.mxu0
        %v836 = vadd.f32 %v375, %v835
        %v837 = vpop.f32.mrf.mxu0
        %v838 = vpop.f32.mrf.mxu0
        %v839 = vadd.f32 %v375, %v838
        %v840 = vpop.f32.mrf.mxu0
        %841 = vmatprep.mubr.bf16.mxu0 %v574
        %842 = vmatmul.mubr.bf16.gmra.mxu0 %v573
        %v843 = vpop.f32.mrf.mxu0
        %v844 = vadd.f32 %v375, %v843
        %v845 = vpop.f32.mrf.mxu0
        %v846 = vpop.f32.mrf.mxu0
        %v847 = vadd.f32 %v375, %v846
        %v848 = vpop.f32.mrf.mxu0
        %849 = vmatprep.mubr.bf16.mxu0 %v576
        %850 = vmatmul.mubr.bf16.gmra.mxu0 %v575
        %v851 = vpop.f32.mrf.mxu0
        %v852 = vadd.f32 %v375, %v851
        %v853 = vpop.f32.mrf.mxu0
        %v854 = vpop.f32.mrf.mxu0
        %v855 = vadd.f32 %v375, %v854
        %v856 = vpop.f32.mrf.mxu0
        %857 = vmatprep.mubr.bf16.mxu0 %v578
        %858 = vmatmul.mubr.bf16.gmra.mxu0 %v577
        %v859 = vpop.f32.mrf.mxu0
        %v860 = vadd.f32 %v375, %v859
        %v861 = vpop.f32.mrf.mxu0
        %v862 = vpop.f32.mrf.mxu0
        %v863 = vadd.f32 %v375, %v862
        %v864 = vpop.f32.mrf.mxu0
        %865 = vmatprep.mubr.bf16.mxu0 %v580
        %866 = vmatmul.mubr.bf16.gmra.mxu0 %v579
        %v867 = vpop.f32.mrf.mxu0
        %v868 = vadd.f32 %v375, %v867
        %v869 = vpop.f32.mrf.mxu0
        %v870 = vpop.f32.mrf.mxu0
        %v871 = vadd.f32 %v375, %v870
        %v872 = vpop.f32.mrf.mxu0
        %873 = vmatprep.mubr.bf16.mxu0 %v582
        %874 = vmatmul.mubr.bf16.gmra.mxu0 %v581
        %v875 = vpop.f32.mrf.mxu0
        %v876 = vadd.f32 %v375, %v875
        %v877 = vpop.f32.mrf.mxu0
        %v878 = vpop.f32.mrf.mxu0
        %v879 = vadd.f32 %v375, %v878
        %v880 = vpop.f32.mrf.mxu0
        %881 = vmatprep.mubr.bf16.mxu0 %v584
        %882 = vmatmul.mubr.bf16.gmra.mxu0 %v583
        %v883 = vpop.f32.mrf.mxu0
        %v884 = vadd.f32 %v375, %v883
        %v885 = vpop.f32.mrf.mxu0
        %v886 = vpop.f32.mrf.mxu0
        %v887 = vadd.f32 %v375, %v886
        %v888 = vpop.f32.mrf.mxu0
        %889 = vmatprep.mubr.bf16.mxu0 %v586
        %890 = vmatmul.mubr.bf16.gmra.mxu0 %v585
        %v891 = vpop.f32.mrf.mxu0
        %v892 = vadd.f32 %v375, %v891
        %v893 = vpop.f32.mrf.mxu0
        %v894 = vpop.f32.mrf.mxu0
        %v895 = vadd.f32 %v375, %v894
        %v896 = vpop.f32.mrf.mxu0
        %897 = vmatprep.mubr.bf16.mxu0 %v588
        %898 = vmatmul.mubr.bf16.gmra.mxu0 %v587
        %v899 = vpop.f32.mrf.mxu0
        %v900 = vadd.f32 %v375, %v899
        %v901 = vpop.f32.mrf.mxu0
        %v902 = vpop.f32.mrf.mxu0
        %v903 = vadd.f32 %v375, %v902
        %v904 = vpop.f32.mrf.mxu0
        %905 = vmatprep.mubr.bf16.mxu0 %v590
        %906 = vmatmul.mubr.bf16.gmra.mxu0 %v589
        %v907 = vpop.f32.mrf.mxu0
        %v908 = vadd.f32 %v375, %v907
        %v909 = vpop.f32.mrf.mxu0
        %v910 = vpop.f32.mrf.mxu0
        %v911 = vadd.f32 %v375, %v910
        %v912 = vpop.f32.mrf.mxu0
        %913 = vmatprep.mubr.bf16.mxu0 %v592
        %914 = vmatmul.mubr.bf16.gmra.mxu0 %v591
        %v915 = vpop.f32.mrf.mxu0
        %v916 = vadd.f32 %v375, %v915
        %v917 = vpop.f32.mrf.mxu0
        %v918 = vpop.f32.mrf.mxu0
        %v919 = vadd.f32 %v375, %v918
        %v920 = vpop.f32.mrf.mxu0
        %921 = vmatprep.mubr.bf16.mxu0 %v594
        %922 = vmatmul.mubr.bf16.gmra.mxu0 %v593
        %v923 = vpop.f32.mrf.mxu0
        %v924 = vadd.f32 %v375, %v923
        %v925 = vpop.f32.mrf.mxu0
        %v926 = vpop.f32.mrf.mxu0
        %v927 = vadd.f32 %v375, %v926
        %v928 = vpop.f32.mrf.mxu0
        %929 = vmatprep.mubr.bf16.mxu0 %v596
        %930 = vmatmul.mubr.bf16.gmra.mxu0 %v595
        %v931 = vpop.f32.mrf.mxu0
        %v932 = vadd.f32 %v375, %v931
        %v933 = vpop.f32.mrf.mxu0
        %v934 = vpop.f32.mrf.mxu0
        %v935 = vadd.f32 %v375, %v934
        %v936 = vpop.f32.mrf.mxu0
        %937 = vmatprep.mubr.bf16.mxu0 %v598
        %938 = vmatmul.mubr.bf16.gmra.mxu0 %v597
        %v939 = vpop.f32.mrf.mxu0
        %v940 = vadd.f32 %v375, %v939
        %v941 = vpop.f32.mrf.mxu0
        %v942 = vpop.f32.mrf.mxu0
        %v943 = vadd.f32 %v375, %v942
        %v944 = vpop.f32.mrf.mxu0
        %945 = vmatprep.mubr.bf16.mxu0 %v600
        %946 = vmatmul.mubr.bf16.gmra.mxu0 %v599
        %v947 = vpop.f32.mrf.mxu0
        %v948 = vadd.f32 %v375, %v947
        %v949 = vpop.f32.mrf.mxu0
        %v950 = vpop.f32.mrf.mxu0
        %v951 = vadd.f32 %v375, %v950
        %v952 = vpop.f32.mrf.mxu0
        %953 = vmatprep.mubr.bf16.mxu0 %v602
        %954 = vmatmul.mubr.bf16.gmra.mxu0 %v601
        %v955 = vpop.f32.mrf.mxu0
        %v956 = vadd.f32 %v375, %v955
        %v957 = vpop.f32.mrf.mxu0
        %v958 = vpop.f32.mrf.mxu0
        %v959 = vadd.f32 %v375, %v958
        %v960 = vpop.f32.mrf.mxu0
        %961 = vmatprep.mubr.bf16.mxu0 %v604
        %962 = vmatmul.mubr.bf16.gmra.mxu0 %v603
        %v963 = vpop.f32.mrf.mxu0
        %v964 = vadd.f32 %v375, %v963
        %v965 = vpop.f32.mrf.mxu0
        %v966 = vpop.f32.mrf.mxu0
        %v967 = vadd.f32 %v375, %v966
        %v968 = vpop.f32.mrf.mxu0
        %969 = vmatprep.mubr.bf16.mxu0 %v606
        %970 = vmatmul.mubr.bf16.gmra.mxu0 %v605
        %v971 = vpop.f32.mrf.mxu0
        %v972 = vadd.f32 %v375, %v971
        %v973 = vpop.f32.mrf.mxu0
        %v974 = vpop.f32.mrf.mxu0
        %v975 = vadd.f32 %v375, %v974
        %v976 = vpop.f32.mrf.mxu0
        %977 = vmatprep.mubr.bf16.mxu0 %v608
        %978 = vmatmul.mubr.bf16.gmra.mxu0 %v607
        %v979 = vpop.f32.mrf.mxu0
        %v980 = vadd.f32 %v375, %v979
        %v981 = vpop.f32.mrf.mxu0
        %v982 = vpop.f32.mrf.mxu0
        %v983 = vadd.f32 %v375, %v982
        %v984 = vpop.f32.mrf.mxu0
        %985 = vmatprep.mubr.bf16.mxu0 %v610
        %986 = vmatmul.mubr.bf16.gmra.mxu0 %v609
        %v987 = vpop.f32.mrf.mxu0
        %v988 = vadd.f32 %v375, %v987
        %v989 = vpop.f32.mrf.mxu0
        %v990 = vpop.f32.mrf.mxu0
        %v991 = vadd.f32 %v375, %v990
        %v992 = vpop.f32.mrf.mxu0
        %993 = vmatprep.mubr.bf16.mxu0 %v612
        %994 = vmatmul.mubr.bf16.gmra.mxu0 %v611
        %v995 = vpop.f32.mrf.mxu0
        %v996 = vadd.f32 %v375, %v995
        %v997 = vpop.f32.mrf.mxu0
        %v998 = vpop.f32.mrf.mxu0
        %v999 = vadd.f32 %v375, %v998
        %v1000 = vpop.f32.mrf.mxu0
        %1001 = vmatprep.mubr.bf16.mxu0 %v614
        %1002 = vmatmul.mubr.bf16.gmra.mxu0 %v613
        %v1003 = vpop.f32.mrf.mxu0
        %v1004 = vadd.f32 %v375, %v1003
        %v1005 = vpop.f32.mrf.mxu0
        %v1006 = vpop.f32.mrf.mxu0
        %v1007 = vadd.f32 %v375, %v1006
        %v1008 = vpop.f32.mrf.mxu0
        %1009 = vmatprep.mubr.bf16.mxu0 %v616
        %1010 = vmatmul.mubr.bf16.gmra.mxu0 %v615
        %v1011 = vpop.f32.mrf.mxu0
        %v1012 = vadd.f32 %v375, %v1011
        %v1013 = vpop.f32.mrf.mxu0
        %v1014 = vpop.f32.mrf.mxu0
        %v1015 = vadd.f32 %v375, %v1014
        %v1016 = vpop.f32.mrf.mxu0
        %1017 = vmatprep.mubr.bf16.mxu0 %v618
        %1018 = vmatmul.mubr.bf16.gmra.mxu0 %v617
        %v1019 = vpop.f32.mrf.mxu0
        %v1020 = vadd.f32 %v375, %v1019
        %v1021 = vpop.f32.mrf.mxu0
        %v1022 = vpop.f32.mrf.mxu0
        %v1023 = vadd.f32 %v375, %v1022
        %v1024 = vpop.f32.mrf.mxu0
        %1025 = vmatprep.mubr.bf16.mxu0 %v620
        %1026 = vmatmul.mubr.bf16.gmra.mxu0 %v619
        %v1027 = vpop.f32.mrf.mxu0
        %v1028 = vadd.f32 %v375, %v1027
        %v1029 = vpop.f32.mrf.mxu0
        %v1030 = vpop.f32.mrf.mxu0
        %v1031 = vadd.f32 %v375, %v1030
        %v1032 = vpop.f32.mrf.mxu0
        %1033 = vmatprep.mubr.bf16.mxu0 %v622
        %1034 = vmatmul.mubr.bf16.gmra.mxu0 %v621
        %v1035 = vpop.f32.mrf.mxu0
        %v1036 = vadd.f32 %v375, %v1035
        %v1037 = vpop.f32.mrf.mxu0
        %v1038 = vpop.f32.mrf.mxu0
        %v1039 = vadd.f32 %v375, %v1038
        %v1040 = vpop.f32.mrf.mxu0
        %1041 = vmatprep.mubr.bf16.mxu0 %v624
        %1042 = vmatmul.mubr.bf16.gmra.mxu0 %v623
        %v1043 = vpop.f32.mrf.mxu0
        %v1044 = vadd.f32 %v375, %v1043
        %v1045 = vpop.f32.mrf.mxu0
        %v1046 = vpop.f32.mrf.mxu0
        %v1047 = vadd.f32 %v375, %v1046
        %v1048 = vpop.f32.mrf.mxu0
        %1049 = vmatprep.mubr.bf16.mxu0 %v626
        %1050 = vmatmul.mubr.bf16.gmra.mxu0 %v625
        %v1051 = vpop.f32.mrf.mxu0
        %v1052 = vadd.f32 %v375, %v1051
        %v1053 = vpop.f32.mrf.mxu0
        %v1054 = vpop.f32.mrf.mxu0
        %v1055 = vadd.f32 %v375, %v1054
        %v1056 = vpop.f32.mrf.mxu0
        %1057 = vmatprep.mubr.bf16.mxu0 %v628
        %1058 = vmatmul.mubr.bf16.gmra.mxu0 %v627
        %v1059 = vpop.f32.mrf.mxu0
        %v1060 = vadd.f32 %v375, %v1059
        %v1061 = vpop.f32.mrf.mxu0
        %v1062 = vpop.f32.mrf.mxu0
        %v1063 = vadd.f32 %v375, %v1062
        %v1064 = vpop.f32.mrf.mxu0
        %1065 = vmatprep.mubr.bf16.mxu0 %v630
        %1066 = vmatmul.mubr.bf16.gmra.mxu0 %v629
        %v1067 = vpop.f32.mrf.mxu0
        %v1068 = vadd.f32 %v375, %v1067
        %v1069 = vpop.f32.mrf.mxu0
        %v1070 = vpop.f32.mrf.mxu0
        %v1071 = vadd.f32 %v375, %v1070
        %v1072 = vpop.f32.mrf.mxu0
        %1073 = vmatprep.mubr.bf16.mxu0 %v632
        %1074 = vmatmul.mubr.bf16.gmra.mxu0 %v631
        %v1075 = vpop.f32.mrf.mxu0
        %v1076 = vadd.f32 %v375, %v1075
        %v1077 = vpop.f32.mrf.mxu0
        %v1078 = vpop.f32.mrf.mxu0
        %v1079 = vadd.f32 %v375, %v1078
        %v1080 = vpop.f32.mrf.mxu0
        %1081 = vdwg.mxu0
        %v1082 = vmax.f32 %v828, 0.0
        %v1083 = vmax.f32 %v831, 0.0
        %v1084 = vmax.f32 %v836, 0.0
        %v1085 = vmax.f32 %v839, 0.0
        %v1086 = vmax.f32 %v844, 0.0
        %v1087 = vmax.f32 %v847, 0.0
        %v1088 = vmax.f32 %v852, 0.0
        %v1089 = vmax.f32 %v855, 0.0
        %v1090 = vmax.f32 %v860, 0.0
        %v1091 = vmax.f32 %v863, 0.0
        %v1092 = vmax.f32 %v868, 0.0
        %v1093 = vmax.f32 %v871, 0.0
        %v1094 = vmax.f32 %v876, 0.0
        %v1095 = vmax.f32 %v879, 0.0
        %v1096 = vmax.f32 %v884, 0.0
        %v1097 = vmax.f32 %v887, 0.0
        %v1098 = vmax.f32 %v892, 0.0
        %v1099 = vmax.f32 %v895, 0.0
        %v1100 = vmax.f32 %v900, 0.0
        %v1101 = vmax.f32 %v903, 0.0
        %v1102 = vmax.f32 %v908, 0.0
        %v1103 = vmax.f32 %v911, 0.0
        %v1104 = vmax.f32 %v916, 0.0
        %v1105 = vmax.f32 %v919, 0.0
        %v1106 = vmax.f32 %v924, 0.0
        %v1107 = vmax.f32 %v927, 0.0
        %v1108 = vmax.f32 %v932, 0.0
        %v1109 = vmax.f32 %v935, 0.0
        %v1110 = vmax.f32 %v940, 0.0
        %v1111 = vmax.f32 %v943, 0.0
        %v1112 = vmax.f32 %v948, 0.0
        %v1113 = vmax.f32 %v951, 0.0
        %v1114 = vmax.f32 %v956, 0.0
        %v1115 = vmax.f32 %v959, 0.0
        %v1116 = vmax.f32 %v964, 0.0
        %v1117 = vmax.f32 %v967, 0.0
        %v1118 = vmax.f32 %v972, 0.0
        %v1119 = vmax.f32 %v975, 0.0
        %v1120 = vmax.f32 %v980, 0.0
        %v1121 = vmax.f32 %v983, 0.0
        %v1122 = vmax.f32 %v988, 0.0
        %v1123 = vmax.f32 %v991, 0.0
        %v1124 = vmax.f32 %v996, 0.0
        %v1125 = vmax.f32 %v999, 0.0
        %v1126 = vmax.f32 %v1004, 0.0
        %v1127 = vmax.f32 %v1007, 0.0
        %v1128 = vmax.f32 %v1012, 0.0
        %v1129 = vmax.f32 %v1015, 0.0
        %v1130 = vmax.f32 %v1020, 0.0
        %v1131 = vmax.f32 %v1023, 0.0
        %v1132 = vmax.f32 %v1028, 0.0
        %v1133 = vmax.f32 %v1031, 0.0
        %v1134 = vmax.f32 %v1036, 0.0
        %v1135 = vmax.f32 %v1039, 0.0
        %v1136 = vmax.f32 %v1044, 0.0
        %v1137 = vmax.f32 %v1047, 0.0
        %v1138 = vmax.f32 %v1052, 0.0
        %v1139 = vmax.f32 %v1055, 0.0
        %v1140 = vmax.f32 %v1060, 0.0
        %v1141 = vmax.f32 %v1063, 0.0
        %v1142 = vmax.f32 %v1068, 0.0
        %v1143 = vmax.f32 %v1071, 0.0
        %v1144 = vmax.f32 %v1076, 0.0
        %v1145 = vmax.f32 %v1079, 0.0
        %v1146 = vpack.c.bf16 %v1083, %v1082
        %v1147 = vpack.c.bf16 %v1085, %v1084
        %v1148 = vpack.c.bf16 %v1087, %v1086
        %v1149 = vpack.c.bf16 %v1089, %v1088
        %v1150 = vpack.c.bf16 %v1091, %v1090
        %v1151 = vpack.c.bf16 %v1093, %v1092
        %v1152 = vpack.c.bf16 %v1095, %v1094
        %v1153 = vpack.c.bf16 %v1097, %v1096
        %v1154 = vpack.c.bf16 %v1099, %v1098
        %v1155 = vpack.c.bf16 %v1101, %v1100
        %v1156 = vpack.c.bf16 %v1103, %v1102
        %v1157 = vpack.c.bf16 %v1105, %v1104
        %v1158 = vpack.c.bf16 %v1107, %v1106
        %v1159 = vpack.c.bf16 %v1109, %v1108
        %v1160 = vpack.c.bf16 %v1111, %v1110
        %v1161 = vpack.c.bf16 %v1113, %v1112
        %v1162 = vpack.c.bf16 %v1115, %v1114
        %v1163 = vpack.c.bf16 %v1117, %v1116
        %v1164 = vpack.c.bf16 %v1119, %v1118
        %v1165 = vpack.c.bf16 %v1121, %v1120
        %v1166 = vpack.c.bf16 %v1123, %v1122
        %v1167 = vpack.c.bf16 %v1125, %v1124
        %v1168 = vpack.c.bf16 %v1127, %v1126
        %v1169 = vpack.c.bf16 %v1129, %v1128
        %v1170 = vpack.c.bf16 %v1131, %v1130
        %v1171 = vpack.c.bf16 %v1133, %v1132
        %v1172 = vpack.c.bf16 %v1135, %v1134
        %v1173 = vpack.c.bf16 %v1137, %v1136
        %v1174 = vpack.c.bf16 %v1139, %v1138
        %v1175 = vpack.c.bf16 %v1141, %v1140
        %v1176 = vpack.c.bf16 %v1143, %v1142
        %v1177 = vpack.c.bf16 %v1145, %v1144
        %v1210 = vunpack.c.l.b16 %v1146
        %v1211 = vunpack.c.h.b16 %v1146
        %v1212 = vunpack.c.l.b16 %v1147
        %v1213 = vunpack.c.h.b16 %v1147
        %v1214 = vunpack.c.l.b16 %v1148
        %v1215 = vunpack.c.h.b16 %v1148
        %v1216 = vunpack.c.l.b16 %v1149
        %v1217 = vunpack.c.h.b16 %v1149
        %v1218 = vunpack.c.l.b16 %v1150
        %v1219 = vunpack.c.h.b16 %v1150
        %v1220 = vunpack.c.l.b16 %v1151
        %v1221 = vunpack.c.h.b16 %v1151
        %v1222 = vunpack.c.l.b16 %v1152
        %v1223 = vunpack.c.h.b16 %v1152
        %v1224 = vunpack.c.l.b16 %v1153
        %v1225 = vunpack.c.h.b16 %v1153
        %v1226 = vunpack.c.l.b16 %v1154
        %v1227 = vunpack.c.h.b16 %v1154
        %v1228 = vunpack.c.l.b16 %v1155
        %v1229 = vunpack.c.h.b16 %v1155
        %v1230 = vunpack.c.l.b16 %v1156
        %v1231 = vunpack.c.h.b16 %v1156
        %v1232 = vunpack.c.l.b16 %v1157
        %v1233 = vunpack.c.h.b16 %v1157
        %v1234 = vunpack.c.l.b16 %v1158
        %v1235 = vunpack.c.h.b16 %v1158
        %v1236 = vunpack.c.l.b16 %v1159
        %v1237 = vunpack.c.h.b16 %v1159
        %v1238 = vunpack.c.l.b16 %v1160
        %v1239 = vunpack.c.h.b16 %v1160
        %v1240 = vunpack.c.l.b16 %v1161
        %v1241 = vunpack.c.h.b16 %v1161
        %v1242 = vunpack.c.l.b16 %v1162
        %v1243 = vunpack.c.h.b16 %v1162
        %v1244 = vunpack.c.l.b16 %v1163
        %v1245 = vunpack.c.h.b16 %v1163
        %v1246 = vunpack.c.l.b16 %v1164
        %v1247 = vunpack.c.h.b16 %v1164
        %v1248 = vunpack.c.l.b16 %v1165
        %v1249 = vunpack.c.h.b16 %v1165
        %v1250 = vunpack.c.l.b16 %v1166
        %v1251 = vunpack.c.h.b16 %v1166
        %v1252 = vunpack.c.l.b16 %v1167
        %v1253 = vunpack.c.h.b16 %v1167
        %v1254 = vunpack.c.l.b16 %v1168
        %v1255 = vunpack.c.h.b16 %v1168
        %v1256 = vunpack.c.l.b16 %v1169
        %v1257 = vunpack.c.h.b16 %v1169
        %v1258 = vunpack.c.l.b16 %v1170
        %v1259 = vunpack.c.h.b16 %v1170
        %v1260 = vunpack.c.l.b16 %v1171
        %v1261 = vunpack.c.h.b16 %v1171
        %v1262 = vunpack.c.l.b16 %v1172
        %v1263 = vunpack.c.h.b16 %v1172
        %v1264 = vunpack.c.l.b16 %v1173
        %v1265 = vunpack.c.h.b16 %v1173
        %v1266 = vunpack.c.l.b16 %v1174
        %v1267 = vunpack.c.h.b16 %v1174
        %v1268 = vunpack.c.l.b16 %v1175
        %v1269 = vunpack.c.h.b16 %v1175
        %v1270 = vunpack.c.l.b16 %v1176
        %v1271 = vunpack.c.h.b16 %v1176
        %v1272 = vunpack.c.l.b16 %v1177
        %v1273 = vunpack.c.h.b16 %v1177
        %v1274 = vpack.c.b16 %v1210, %v1210
        %v1275 = vpack.c.b16 %v1211, %v1211
        %v1276 = vpack.c.b16 %v1212, %v1212
        %v1277 = vpack.c.b16 %v1213, %v1213
        %v1278 = vpack.c.b16 %v1214, %v1214
        %v1279 = vpack.c.b16 %v1215, %v1215
        %v1280 = vpack.c.b16 %v1216, %v1216
        %v1281 = vpack.c.b16 %v1217, %v1217
        %v1282 = vpack.c.b16 %v1218, %v1218
        %v1283 = vpack.c.b16 %v1219, %v1219
        %v1284 = vpack.c.b16 %v1220, %v1220
        %v1285 = vpack.c.b16 %v1221, %v1221
        %v1286 = vpack.c.b16 %v1222, %v1222
        %v1287 = vpack.c.b16 %v1223, %v1223
        %v1288 = vpack.c.b16 %v1224, %v1224
        %v1289 = vpack.c.b16 %v1225, %v1225
        %v1290 = vpack.c.b16 %v1226, %v1226
        %v1291 = vpack.c.b16 %v1227, %v1227
        %v1292 = vpack.c.b16 %v1228, %v1228
        %v1293 = vpack.c.b16 %v1229, %v1229
        %v1294 = vpack.c.b16 %v1230, %v1230
        %v1295 = vpack.c.b16 %v1231, %v1231
        %v1296 = vpack.c.b16 %v1232, %v1232
        %v1297 = vpack.c.b16 %v1233, %v1233
        %v1298 = vpack.c.b16 %v1234, %v1234
        %v1299 = vpack.c.b16 %v1235, %v1235
        %v1300 = vpack.c.b16 %v1236, %v1236
        %v1301 = vpack.c.b16 %v1237, %v1237
        %v1302 = vpack.c.b16 %v1238, %v1238
        %v1303 = vpack.c.b16 %v1239, %v1239
        %v1304 = vpack.c.b16 %v1240, %v1240
        %v1305 = vpack.c.b16 %v1241, %v1241
        %v1306 = vpack.c.b16 %v1242, %v1242
        %v1307 = vpack.c.b16 %v1243, %v1243
        %v1308 = vpack.c.b16 %v1244, %v1244
        %v1309 = vpack.c.b16 %v1245, %v1245
        %v1310 = vpack.c.b16 %v1246, %v1246
        %v1311 = vpack.c.b16 %v1247, %v1247
        %v1312 = vpack.c.b16 %v1248, %v1248
        %v1313 = vpack.c.b16 %v1249, %v1249
        %v1314 = vpack.c.b16 %v1250, %v1250
        %v1315 = vpack.c.b16 %v1251, %v1251
        %v1316 = vpack.c.b16 %v1252, %v1252
        %v1317 = vpack.c.b16 %v1253, %v1253
        %v1318 = vpack.c.b16 %v1254, %v1254
        %v1319 = vpack.c.b16 %v1255, %v1255
        %v1320 = vpack.c.b16 %v1256, %v1256
        %v1321 = vpack.c.b16 %v1257, %v1257
        %v1322 = vpack.c.b16 %v1258, %v1258
        %v1323 = vpack.c.b16 %v1259, %v1259
        %v1324 = vpack.c.b16 %v1260, %v1260
        %v1325 = vpack.c.b16 %v1261, %v1261
        %v1326 = vpack.c.b16 %v1262, %v1262
        %v1327 = vpack.c.b16 %v1263, %v1263
        %v1328 = vpack.c.b16 %v1264, %v1264
        %v1329 = vpack.c.b16 %v1265, %v1265
        %v1330 = vpack.c.b16 %v1266, %v1266
        %v1331 = vpack.c.b16 %v1267, %v1267
        %v1332 = vpack.c.b16 %v1268, %v1268
        %v1333 = vpack.c.b16 %v1269, %v1269
        %v1334 = vpack.c.b16 %v1270, %v1270
        %v1335 = vpack.c.b16 %v1271, %v1271
        %v1336 = vpack.c.b16 %v1272, %v1272
        %v1337 = vpack.c.b16 %v1273, %v1273
        %vm1402 = vcmask 519168
        %1403 = vst.msk [vmem:[%s271] sm:$0xf] %vm1402, %v1274
        %1404 = vst.msk [vmem:[%s271 + $0x4] sm:$0xf] %vm1402, %v1275
        %1405 = vst.msk [vmem:[%s271 + $0x8] sm:$0xf] %vm1402, %v1276
        %1406 = vst.msk [vmem:[%s271 + $0xc] sm:$0xf] %vm1402, %v1277
        %1407 = vst.msk [vmem:[%s271 + $0x10] sm:$0xf] %vm1402, %v1278
        %1408 = vst.msk [vmem:[%s271 + $0x14] sm:$0xf] %vm1402, %v1279
        %1409 = vst.msk [vmem:[%s271 + $0x18] sm:$0xf] %vm1402, %v1280
        %1410 = vst.msk [vmem:[%s271 + $0x1c] sm:$0xf] %vm1402, %v1281
        %1411 = vst.msk [vmem:[%s271 + $0x20] sm:$0xf] %vm1402, %v1282
        %1412 = vst.msk [vmem:[%s271 + $0x24] sm:$0xf] %vm1402, %v1283
        %1413 = vst.msk [vmem:[%s271 + $0x28] sm:$0xf] %vm1402, %v1284
        %1414 = vst.msk [vmem:[%s271 + $0x2c] sm:$0xf] %vm1402, %v1285
        %1415 = vst.msk [vmem:[%s271 + $0x30] sm:$0xf] %vm1402, %v1286
        %1416 = vst.msk [vmem:[%s271 + $0x34] sm:$0xf] %vm1402, %v1287
        %1417 = vst.msk [vmem:[%s271 + $0x38] sm:$0xf] %vm1402, %v1288
        %1418 = vst.msk [vmem:[%s271 + $0x3c] sm:$0xf] %vm1402, %v1289
        %1419 = vst.msk [vmem:[%s271 + $0x40] sm:$0xf] %vm1402, %v1290
        %1420 = vst.msk [vmem:[%s271 + $0x44] sm:$0xf] %vm1402, %v1291
        %1421 = vst.msk [vmem:[%s271 + $0x48] sm:$0xf] %vm1402, %v1292
        %1422 = vst.msk [vmem:[%s271 + $0x4c] sm:$0xf] %vm1402, %v1293
        %1423 = vst.msk [vmem:[%s271 + $0x50] sm:$0xf] %vm1402, %v1294
        %1424 = vst.msk [vmem:[%s271 + $0x54] sm:$0xf] %vm1402, %v1295
        %1425 = vst.msk [vmem:[%s271 + $0x58] sm:$0xf] %vm1402, %v1296
        %1426 = vst.msk [vmem:[%s271 + $0x5c] sm:$0xf] %vm1402, %v1297
        %1427 = vst.msk [vmem:[%s271 + $0x60] sm:$0xf] %vm1402, %v1298
        %1428 = vst.msk [vmem:[%s271 + $0x64] sm:$0xf] %vm1402, %v1299
        %1429 = vst.msk [vmem:[%s271 + $0x68] sm:$0xf] %vm1402, %v1300
        %1430 = vst.msk [vmem:[%s271 + $0x6c] sm:$0xf] %vm1402, %v1301
        %1431 = vst.msk [vmem:[%s271 + $0x70] sm:$0xf] %vm1402, %v1302
        %1432 = vst.msk [vmem:[%s271 + $0x74] sm:$0xf] %vm1402, %v1303
        %1433 = vst.msk [vmem:[%s271 + $0x78] sm:$0xf] %vm1402, %v1304
        %1434 = vst.msk [vmem:[%s271 + $0x7c] sm:$0xf] %vm1402, %v1305
        %1435 = vst.msk [vmem:[%s271 + $0x80] sm:$0xf] %vm1402, %v1306
        %1436 = vst.msk [vmem:[%s271 + $0x84] sm:$0xf] %vm1402, %v1307
        %1437 = vst.msk [vmem:[%s271 + $0x88] sm:$0xf] %vm1402, %v1308
        %1438 = vst.msk [vmem:[%s271 + $0x8c] sm:$0xf] %vm1402, %v1309
        %1439 = vst.msk [vmem:[%s271 + $0x90] sm:$0xf] %vm1402, %v1310
        %1440 = vst.msk [vmem:[%s271 + $0x94] sm:$0xf] %vm1402, %v1311
        %1441 = vst.msk [vmem:[%s271 + $0x98] sm:$0xf] %vm1402, %v1312
        %1442 = vst.msk [vmem:[%s271 + $0x9c] sm:$0xf] %vm1402, %v1313
        %1443 = vst.msk [vmem:[%s271 + $0xa0] sm:$0xf] %vm1402, %v1314
        %1444 = vst.msk [vmem:[%s271 + $0xa4] sm:$0xf] %vm1402, %v1315
        %1445 = vst.msk [vmem:[%s271 + $0xa8] sm:$0xf] %vm1402, %v1316
        %1446 = vst.msk [vmem:[%s271 + $0xac] sm:$0xf] %vm1402, %v1317
        %1447 = vst.msk [vmem:[%s271 + $0xb0] sm:$0xf] %vm1402, %v1318
        %1448 = vst.msk [vmem:[%s271 + $0xb4] sm:$0xf] %vm1402, %v1319
        %1449 = vst.msk [vmem:[%s271 + $0xb8] sm:$0xf] %vm1402, %v1320
        %1450 = vst.msk [vmem:[%s271 + $0xbc] sm:$0xf] %vm1402, %v1321
        %1451 = vst.msk [vmem:[%s271 + $0xc0] sm:$0xf] %vm1402, %v1322
        %1452 = vst.msk [vmem:[%s271 + $0xc4] sm:$0xf] %vm1402, %v1323
        %1453 = vst.msk [vmem:[%s271 + $0xc8] sm:$0xf] %vm1402, %v1324
        %1454 = vst.msk [vmem:[%s271 + $0xcc] sm:$0xf] %vm1402, %v1325
        %1455 = vst.msk [vmem:[%s271 + $0xd0] sm:$0xf] %vm1402, %v1326
        %1456 = vst.msk [vmem:[%s271 + $0xd4] sm:$0xf] %vm1402, %v1327
        %1457 = vst.msk [vmem:[%s271 + $0xd8] sm:$0xf] %vm1402, %v1328
        %1458 = vst.msk [vmem:[%s271 + $0xdc] sm:$0xf] %vm1402, %v1329
        %1459 = vst.msk [vmem:[%s271 + $0xe0] sm:$0xf] %vm1402, %v1330
        %1460 = vst.msk [vmem:[%s271 + $0xe4] sm:$0xf] %vm1402, %v1331
        %1461 = vst.msk [vmem:[%s271 + $0xe8] sm:$0xf] %vm1402, %v1332
        %1462 = vst.msk [vmem:[%s271 + $0xec] sm:$0xf] %vm1402, %v1333
        %1463 = vst.msk [vmem:[%s271 + $0xf0] sm:$0xf] %vm1402, %v1334
        %1464 = vst.msk [vmem:[%s271 + $0xf4] sm:$0xf] %vm1402, %v1335
        %1465 = vst.msk [vmem:[%s271 + $0xf8] sm:$0xf] %vm1402, %v1336
        %1466 = vst.msk [vmem:[%s271 + $0xfc] sm:$0xf] %vm1402, %v1337
        %s1467 = smul.u32 64, %s22
        %p1468 = scmp.lt.s32.totalorder %s1467, 255
        %s1469 = scalar_select %p1468, %s1467, 255
        %p1470 = scmp.lt.s32.totalorder %s23, 0
        %s1471 = scalar_select %p1470, %s23, 0
        %s1472 = sadd.s32 %s1471, %s1469
        %s1473 = smul.addr %s1472, 4
        %s1474 = scalar_lea.vmem %s3, %s1473
        // Predicated region
        $region37: #{tpu_custom_call.1} parent=31 // pred_check
          %p1475 = pneg %p138
        $region38: #{tpu_custom_call.1} parent=31 // pred_check_branch
          %1477 = sbr.rel (%p1475) target = $region40
        $region39: #{tpu_custom_call.1} parent=31 // pred_region
          %s1478 = smul.u32 64, %s22
        $region40: #{tpu_custom_call.1} parent=31 // pred_fallthru
          _
      $region32: #{tpu_custom_call.1} parent=5 // pred_fallthru
        _
      %p1479 = scmp.le.s32.totalorder 2, %s12
      // Predicated region
      $region41: #{tpu_custom_call.1} parent=5 // pred_check
        %p1480 = pneg %p1479
      $region42: #{tpu_custom_call.1} parent=5 // pred_check_branch
        %1482 = sbr.rel (%p1480) target = $region44
      $region43: #{tpu_custom_call.1} parent=5 // pred_region
        %s1483 = ssub.s32 %s12, 2
        // Predicated region
        $region45: #{tpu_custom_call.1} parent=43 // pred_check
          %p1484 = pneg %p144
        $region46: #{tpu_custom_call.1} parent=43 // pred_check_branch
          %1486 = sbr.rel (%p1484) target = $region48
        $region47: #{tpu_custom_call.1} parent=43 // pred_region
          %s1487 = smul.u32 64, %s25
          %p1488 = scmp.lt.s32.totalorder %s1487, 255
          %s1489 = scalar_select %p1488, %s1487, 255
          %p1490 = scmp.lt.s32.totalorder %s26, 0
          %s1491 = scalar_select %p1490, %s26, 0
          %s1492 = sadd.s32 %s1491, %s1489
          %s1493 = smul.addr %s1492, 4
          %s1494 = scalar_lea.vmem %s3, %s1493
        $region48: #{tpu_custom_call.1} parent=43 // pred_fallthru
          _
      $region44: #{tpu_custom_call.1} parent=5 // pred_fallthru
        _
    $region6: #{tpu_custom_call.1} parent=1 // loop_footer
      %s16 = sadd.s32 1, %s12
    $region7: #{tpu_custom_call.1} parent=1 // loop_footer_branch
      %11 = sbr.rel target = $region3
    $region8: #{tpu_custom_call.1} parent=1 // loop_exit
      _
    %1495 = vsyncpa [#allocation3], 1
    %s1496 = scalar_lea.sflag [#allocation3], 1
    %1497 = vsyncpa %s1496, 1

</llo_original>
